<compile_context>
chip_gen: v6e
topology: v6e:2x2x1
jax: 0.10.0
libtpu: 0.0.40
codegen_flags: <defaults>
</compile_context>

<pallas_src>
import functools

import jax
import jax.numpy as jnp
from jax import lax
from jax.experimental import pallas as pl
from jax.experimental.pallas import tpu as pltpu


def _round_up(x, m):
    return ((x + m - 1) // m) * m


def _mmpn_kernel(x_ref, p_ref, out_ref, *, H, D_in, C, r_wih, r_whh, r_b, layer_info):
    """B=1 LSTM recurrence + MLP + masked softmax; grid-less, fully VMEM-resident."""
    T = x_ref.shape[0]
    W = out_ref.shape[1]

    # ---- static slices of the single packed parameter buffer (2 operands total) ----
    w_ih = p_ref[r_wih:r_wih + D_in, :4 * H]        # (D_in, 4H), gate order (i, f, o, g)
    w_hh = p_ref[r_whh:r_whh + H, :4 * H]           # (H, 4H)
    b_g = p_ref[r_b:r_b + 1, :4 * H]                # (1, 4H) combined LSTM bias

    # Hoisted non-recurrent projection: one (T, D_in) x (D_in, 4H) matmul + bias.
    gates_in = (jnp.dot(x_ref[...], w_ih, preferred_element_type=jnp.float32) + b_g)

    # Recurrence at B=1, fully unrolled (T small & static), h/c carried in vregs.
    # The gates_in[t:t+1,:] sublane extracts go to the XLU which has slack here.
    h = jnp.zeros((1, H), jnp.float32)
    c = jnp.zeros((1, H), jnp.float32)
    hist = []
    for t in range(T):
        g = gates_in[t:t + 1, :] + jnp.dot(h, w_hh, preferred_element_type=jnp.float32)
        s = jax.nn.sigmoid(g[:, :3 * H])            # i | f | o in one contiguous 3H slab
        g_g = jnp.tanh(g[:, 3 * H:])                # cell candidate
        c = s[:, H:2 * H] * c + s[:, :H] * g_g
        h = s[:, 2 * H:3 * H] * jnp.tanh(c)
        hist.append(h)
    z = jnp.concatenate(hist, axis=0)               # (T, H)  == output1[:, -1, :]

    # third_layer: Lin->ReLU->...->Lin.  Hidden layers at exact width; the LAST layer at
    # the full padded lane width W so the softmax and the store are lane-dense.
    n_mlp = len(layer_info)
    logits = None
    for k, (w_row, d_in, d_out, b_row) in enumerate(layer_info):
        if k != n_mlp - 1:
            w = p_ref[w_row:w_row + d_in, :d_out]
            b = p_ref[b_row:b_row + 1, :d_out]
            z = jnp.maximum(jnp.dot(z, w, preferred_element_type=jnp.float32) + b, 0.0)
        else:
            w = p_ref[w_row:w_row + d_in, :]        # zero-padded past d_out
            b = p_ref[b_row:b_row + 1, :]
            logits = jnp.dot(z, w, preferred_element_type=jnp.float32) + b   # (T, W)

    # Softmax(dim=1) over the first C lanes; padding lanes masked -> exact zeros stored.
    lane = lax.broadcasted_iota(jnp.int32, (T, W), 1)
    logits = jnp.where(lane < C, logits, -jnp.inf)
    m = jnp.max(logits, axis=1, keepdims=True)
    e = jnp.exp(logits - m)
    ssum = jnp.sum(e, axis=1, keepdims=True)
    inv = pl.reciprocal(ssum, approx=True)          # EUP slot
    inv = inv * (2.0 - ssum * inv)                  # one Newton step -> ~f32 accuracy
    out_ref[...] = e * inv                          # lane-dense (T, 128) store


def pack_params(params):
    """One-time parameter packing.  Call at parameter-load time, NOT per forward."""
    w_ih, w_hh, b_ih, b_hh = params["lstm"]          # torch shapes: (4H,D), (4H,H), (4H,), (4H,)
    mlp = params["mlp"]                              # ((w, b), ...) torch Linear: (out,in), (out,)
    H = int(w_hh.shape[1])
    D_in = int(w_ih.shape[1])
    C = int(mlp[-1][0].shape[0])
    n_mlp = len(mlp)

    def reorder(m4h):                                # (i, f, g, o) -> (i, f, o, g)
        i, f, g, o = jnp.split(m4h, 4, axis=0)
        return jnp.concatenate([i, f, o, g], axis=0)

    w_ih_k = jnp.asarray(reorder(w_ih).T, jnp.float32)        # (D_in, 4H)
    w_hh_k = jnp.asarray(reorder(w_hh).T, jnp.float32)        # (H, 4H)
    b_g = jnp.asarray(reorder(b_ih + b_hh), jnp.float32)      # (4H,) combined bias

    W = _round_up(max(4 * H, max(int(w.shape[0]) for (w, _) in mlp)), 128)

    # Row layout inside the single packed buffer; each weight block starts 8-aligned.
    r_wih = 0
    r_whh = _round_up(r_wih + D_in, 8)
    r_b = _round_up(r_whh + H, 8)                    # row r_b: gate bias; r_b+1+k: MLP bias k
    row = _round_up(r_b + 1 + n_mlp, 8)
    starts = []
    for (w, _) in mlp:
        d_in = int(w.shape[1])
        starts.append(row)
        row = _round_up(row + d_in, 8)
    layer_info = tuple((starts[k], int(w.shape[1]), int(w.shape[0]), r_b + 1 + k)
                       for k, (w, _) in enumerate(mlp))
    R = row

    packed = jnp.zeros((R, W), jnp.float32)
    packed = packed.at[r_wih:r_wih + D_in, :4 * H].set(w_ih_k)
    packed = packed.at[r_whh:r_whh + H, :4 * H].set(w_hh_k)
    packed = packed.at[r_b, :4 * H].set(b_g)
    for k, (w, b) in enumerate(mlp):
        w_row, d_in, d_out, b_row = layer_info[k]
        packed = packed.at[w_row:w_row + d_in, :d_out].set(jnp.asarray(w, jnp.float32).T)
        packed = packed.at[b_row, :d_out].set(jnp.asarray(b, jnp.float32))
    packed = jax.device_put(packed)

    meta = dict(H=H, D_in=D_in, C=C, W=W,
                r_wih=r_wih, r_whh=r_whh, r_b=r_b, layer_info=layer_info)
    return packed, meta


def make_forward(params):
    """Packs parameters once and returns a jitted forward mirroring the module's API
    (lstm_second=False path). edge_indices / num_nodes / num_edges / batch_indices are
    unused, exactly as in the PyTorch forward."""
    packed, meta = pack_params(params)
    H, D_in, C, W = meta["H"], meta["D_in"], meta["C"], meta["W"]

    kernel = functools.partial(
        _mmpn_kernel, H=H, D_in=D_in, C=C,
        r_wih=meta["r_wih"], r_whh=meta["r_whh"], r_b=meta["r_b"],
        layer_info=meta["layer_info"])
    vmem = pl.BlockSpec(memory_space=pltpu.MemorySpace.VMEM)

    @jax.jit
    def _impl(packed_p, nodes, global_attr):
        T, B, _ = nodes.shape
        Fg = global_attr.shape[1]
        ga = global_attr.reshape(-1, B, Fg)          # .view(-1, nodes.shape[1], Fg)
        # Only batch row B-1 is consumed downstream (output1[:, -1, :]) and the LSTM
        # batch rows are independent with h0=c0=0 -> run the recurrence at B=1.
        # Slice + concat live INSIDE this jit, so the whole forward is one dispatch.
        x_last = jnp.concatenate([nodes[:, B - 1, :], ga[:, B - 1, :]],
                                 axis=1).astype(jnp.float32)          # (T, D_in)
        out_pad = pl.pallas_call(
            kernel,
            out_shape=jax.ShapeDtypeStruct((T, W), jnp.float32),
            in_specs=[vmem, vmem],
            out_specs=vmem,
        )(x_last, packed_p)
        return out_pad[:, :C]                        # (T, num_classes)

    def forward(nodes, edge_indices, global_attr, num_nodes, num_edges, batch_indices):
        del edge_indices, num_nodes, num_edges, batch_indices   # unused, as in PyTorch
        return _impl(packed, nodes, global_attr)

    return forward


def _reference_forward(nodes, global_attr, params):
    """Pure-JAX replica of the PyTorch forward (full batch) for validation."""
    T, B, _ = nodes.shape
    Fg = global_attr.shape[1]
    x = jnp.concatenate([nodes, global_attr.reshape(-1, B, Fg)], axis=2).astype(jnp.float32)

    w_ih, w_hh, b_ih, b_hh = params["lstm"]
    (w1, b1), (w2, b2), (w3, b3) = params["mlp"]
    H = w_hh.shape[1]

    def step(carry, x_t):
        h, c = carry
        gates = x_t @ w_ih.T + h @ w_hh.T + b_ih + b_hh
        i = jax.nn.sigmoid(gates[:, :H])
        f = jax.nn.sigmoid(gates[:, H:2 * H])
        g = jnp.tanh(gates[:, 2 * H:3 * H])
        o = jax.nn.sigmoid(gates[:, 3 * H:])
        c = f * c + i * g
        h = o * jnp.tanh(c)
        return (h, c), h

    init = (jnp.zeros((B, H), jnp.float32), jnp.zeros((B, H), jnp.float32))
    _, hs = lax.scan(step, init, x)                  # (T, B, H)
    z = hs[:, -1, :]                                 # output1[:, -1, :]
    z = jnp.maximum(z @ w1.T + b1, 0.0)
    z = jnp.maximum(z @ w2.T + b2, 0.0)
    logits = z @ w3.T + b3
    return jax.nn.softmax(logits, axis=1)


def make_params(key, n_features_nodes, n_features_global, layer_1,
                layer_linear="32-16", num_classes=10):
    d_in = n_features_nodes * 2 + n_features_global
    H = layer_1
    ks = jax.random.split(key, 16)
    s = 1.0 / jnp.sqrt(H)
    lstm = (
        jax.random.uniform(ks[0], (4 * H, d_in), jnp.float32, -s, s),   # weight_ih
        jax.random.uniform(ks[1], (4 * H, H), jnp.float32, -s, s),      # weight_hh
        jax.random.uniform(ks[2], (4 * H,), jnp.float32, -s, s),        # bias_ih
        jax.random.uniform(ks[3], (4 * H,), jnp.float32, -s, s),        # bias_hh
    )
    dims = [H] + [int(d) for d in layer_linear.split('-')] + [num_classes]
    mlp = []
    for i in range(len(dims) - 1):
        fan_in, fan_out = dims[i], dims[i + 1]
        b = 1.0 / jnp.sqrt(fan_in)
        w = jax.random.uniform(ks[4 + 2 * i], (fan_out, fan_in), jnp.float32, -b, b)
        bi = jax.random.uniform(ks[5 + 2 * i], (fan_out,), jnp.float32, -b, b)
        mlp.append((w, bi))
    return {"lstm": lstm, "mlp": tuple(mlp)}


if __name__ == "__main__":
    key = jax.random.PRNGKey(0)
    k_nodes, k_glob, k_params = jax.random.split(key, 3)

    # Small shapes consistent with the module's forward (LSTM default (T, B, D) layout).
    n_features_nodes, n_features_global = 4, 8
    layer_1, num_classes = 32, 10
    T, B = 8, 4

    nodes = jax.random.normal(k_nodes, (T, B, 2 * n_features_nodes), jnp.float32)
    global_attr = jax.random.normal(k_glob, (T * B, n_features_global), jnp.float32)
    edge_indices = jnp.zeros((2, 1), jnp.int32)         # unused by forward
    num_nodes = jnp.array([T * B], jnp.int32)           # unused
    num_edges = jnp.array([1], jnp.int32)               # unused
    batch_indices = jnp.zeros((T * B,), jnp.int32)      # unused

    params = make_params(k_params, n_features_nodes, n_features_global, layer_1,
                         layer_linear="32-16", num_classes=num_classes)

    # Parameter packing happens ONCE here (parameter-load time), not per forward call.
    forward = make_forward(params)

    out = forward(nodes, edge_indices, global_attr, num_nodes, num_edges, batch_indices)
    out = jax.block_until_ready(out)
    # Second call exercises the cached executable (single-dispatch path).
    out = jax.block_until_ready(
        forward(nodes, edge_indices, global_attr, num_nodes, num_edges, batch_indices))

    ref = _reference_forward(nodes, global_attr, params)
    assert out.shape == (T, num_classes)
    assert jnp.allclose(out, ref, atol=1e-4, rtol=1e-4), "Pallas output mismatch vs reference"
    assert jnp.allclose(jnp.sum(out, axis=1), 1.0, atol=1e-4)

    print("KERNEL_OK")
</pallas_src>

<mosaic_0001>
module attributes {stable_mosaic.version = 11 : i64} {
  func.func @_mmpn_kernel(%arg0: memref<8x16xf32, #tpu.memory_space<vmem>>, %arg1: memref<136x128xf32, #tpu.memory_space<vmem>>, %arg2: memref<8x128xf32, #tpu.memory_space<vmem>>) attributes {dimension_semantics = [], scalar_prefetch = 0 : i64, scratch_operands = 0 : i64, tpu.core_type = #tpu.core_type<tc>} {
    %c0 = arith.constant 0 : index
    %c0_0 = arith.constant 0 : index
    %0 = vector.load %arg1[%c0, %c0_0] : memref<136x128xf32, #tpu.memory_space<vmem>>, vector<16x128xf32>
    %c16 = arith.constant 16 : index
    %c0_1 = arith.constant 0 : index
    %1 = vector.load %arg1[%c16, %c0_1] : memref<136x128xf32, #tpu.memory_space<vmem>>, vector<32x128xf32>
    %c48 = arith.constant 48 : index
    %c0_2 = arith.constant 0 : index
    %2 = vector.load %arg1[%c48, %c0_2] : memref<136x128xf32, #tpu.memory_space<vmem>>, vector<1x128xf32>
    %c0_3 = arith.constant 0 : index
    %c0_4 = arith.constant 0 : index
    %3 = vector.load %arg0[%c0_3, %c0_4] : memref<8x16xf32, #tpu.memory_space<vmem>>, vector<8x16xf32>
    %cst = arith.constant dense<0.000000e+00> : vector<8x128xf32>
    %4 = tpu.matmul %3, %0, %cst {dimension_numbers = #tpu.dot_dimension_numbers<[1], [0], [0], [1], [0, 0, 1, 1], [], []>} : vector<8x16xf32>, vector<16x128xf32>, vector<8x128xf32> -> vector<8x128xf32>
    %5 = vector.broadcast %2 : vector<1x128xf32> to vector<8x128xf32>
    %6 = arith.addf %4, %5 : vector<8x128xf32>
    %cst_5 = arith.constant 0.000000e+00 : f32
    %7 = vector.broadcast %cst_5 : f32 to vector<1x32xf32>
    %cst_6 = arith.constant 0.000000e+00 : f32
    %8 = vector.broadcast %cst_6 : f32 to vector<1x32xf32>
    %9 = vector.extract_strided_slice %6 {offsets = [0, 0], sizes = [1, 128], strides = [1, 1]} : vector<8x128xf32> to vector<1x128xf32>
    %cst_7 = arith.constant dense<0.000000e+00> : vector<1x128xf32>
    %10 = tpu.matmul %7, %1, %cst_7 {dimension_numbers = #tpu.dot_dimension_numbers<[1], [0], [0], [1], [0, 0, 1, 1], [], []>} : vector<1x32xf32>, vector<32x128xf32>, vector<1x128xf32> -> vector<1x128xf32>
    %11 = arith.addf %9, %10 : vector<1x128xf32>
    %12 = vector.extract_strided_slice %11 {offsets = [0, 0], sizes = [1, 96], strides = [1, 1]} : vector<1x128xf32> to vector<1x96xf32>
    %13 = arith.negf %12 : vector<1x96xf32>
    %14 = math.exp %13 : vector<1x96xf32>
    %cst_8 = arith.constant 1.000000e+00 : f32
    %15 = vector.broadcast %cst_8 : f32 to vector<1x96xf32>
    %16 = arith.addf %15, %14 : vector<1x96xf32>
    %17 = arith.divf %15, %16 : vector<1x96xf32>
    %18 = vector.extract_strided_slice %11 {offsets = [0, 96], sizes = [1, 32], strides = [1, 1]} : vector<1x128xf32> to vector<1x32xf32>
    %19 = math.tanh %18 : vector<1x32xf32>
    %20 = vector.extract_strided_slice %17 {offsets = [0, 32], sizes = [1, 32], strides = [1, 1]} : vector<1x96xf32> to vector<1x32xf32>
    %21 = arith.mulf %20, %8 : vector<1x32xf32>
    %22 = vector.extract_strided_slice %17 {offsets = [0, 0], sizes = [1, 32], strides = [1, 1]} : vector<1x96xf32> to vector<1x32xf32>
    %23 = arith.mulf %22, %19 : vector<1x32xf32>
    %24 = arith.addf %21, %23 : vector<1x32xf32>
    %25 = vector.extract_strided_slice %17 {offsets = [0, 64], sizes = [1, 32], strides = [1, 1]} : vector<1x96xf32> to vector<1x32xf32>
    %26 = math.tanh %24 : vector<1x32xf32>
    %27 = arith.mulf %25, %26 : vector<1x32xf32>
    %28 = vector.extract_strided_slice %6 {offsets = [1, 0], sizes = [1, 128], strides = [1, 1]} : vector<8x128xf32> to vector<1x128xf32>
    %cst_9 = arith.constant dense<0.000000e+00> : vector<1x128xf32>
    %29 = tpu.matmul %27, %1, %cst_9 {dimension_numbers = #tpu.dot_dimension_numbers<[1], [0], [0], [1], [0, 0, 1, 1], [], []>} : vector<1x32xf32>, vector<32x128xf32>, vector<1x128xf32> -> vector<1x128xf32>
    %30 = arith.addf %28, %29 : vector<1x128xf32>
    %31 = vector.extract_strided_slice %30 {offsets = [0, 0], sizes = [1, 96], strides = [1, 1]} : vector<1x128xf32> to vector<1x96xf32>
    %32 = arith.negf %31 : vector<1x96xf32>
    %33 = math.exp %32 : vector<1x96xf32>
    %cst_10 = arith.constant 1.000000e+00 : f32
    %34 = vector.broadcast %cst_10 : f32 to vector<1x96xf32>
    %35 = arith.addf %34, %33 : vector<1x96xf32>
    %36 = arith.divf %34, %35 : vector<1x96xf32>
    %37 = vector.extract_strided_slice %30 {offsets = [0, 96], sizes = [1, 32], strides = [1, 1]} : vector<1x128xf32> to vector<1x32xf32>
    %38 = math.tanh %37 : vector<1x32xf32>
    %39 = vector.extract_strided_slice %36 {offsets = [0, 32], sizes = [1, 32], strides = [1, 1]} : vector<1x96xf32> to vector<1x32xf32>
    %40 = arith.mulf %39, %24 : vector<1x32xf32>
    %41 = vector.extract_strided_slice %36 {offsets = [0, 0], sizes = [1, 32], strides = [1, 1]} : vector<1x96xf32> to vector<1x32xf32>
    %42 = arith.mulf %41, %38 : vector<1x32xf32>
    %43 = arith.addf %40, %42 : vector<1x32xf32>
    %44 = vector.extract_strided_slice %36 {offsets = [0, 64], sizes = [1, 32], strides = [1, 1]} : vector<1x96xf32> to vector<1x32xf32>
    %45 = math.tanh %43 : vector<1x32xf32>
    %46 = arith.mulf %44, %45 : vector<1x32xf32>
    %47 = vector.extract_strided_slice %6 {offsets = [2, 0], sizes = [1, 128], strides = [1, 1]} : vector<8x128xf32> to vector<1x128xf32>
    %cst_11 = arith.constant dense<0.000000e+00> : vector<1x128xf32>
    %48 = tpu.matmul %46, %1, %cst_11 {dimension_numbers = #tpu.dot_dimension_numbers<[1], [0], [0], [1], [0, 0, 1, 1], [], []>} : vector<1x32xf32>, vector<32x128xf32>, vector<1x128xf32> -> vector<1x128xf32>
    %49 = arith.addf %47, %48 : vector<1x128xf32>
    %50 = vector.extract_strided_slice %49 {offsets = [0, 0], sizes = [1, 96], strides = [1, 1]} : vector<1x128xf32> to vector<1x96xf32>
    %51 = arith.negf %50 : vector<1x96xf32>
    %52 = math.exp %51 : vector<1x96xf32>
    %cst_12 = arith.constant 1.000000e+00 : f32
    %53 = vector.broadcast %cst_12 : f32 to vector<1x96xf32>
    %54 = arith.addf %53, %52 : vector<1x96xf32>
    %55 = arith.divf %53, %54 : vector<1x96xf32>
    %56 = vector.extract_strided_slice %49 {offsets = [0, 96], sizes = [1, 32], strides = [1, 1]} : vector<1x128xf32> to vector<1x32xf32>
    %57 = math.tanh %56 : vector<1x32xf32>
    %58 = vector.extract_strided_slice %55 {offsets = [0, 32], sizes = [1, 32], strides = [1, 1]} : vector<1x96xf32> to vector<1x32xf32>
    %59 = arith.mulf %58, %43 : vector<1x32xf32>
    %60 = vector.extract_strided_slice %55 {offsets = [0, 0], sizes = [1, 32], strides = [1, 1]} : vector<1x96xf32> to vector<1x32xf32>
    %61 = arith.mulf %60, %57 : vector<1x32xf32>
    %62 = arith.addf %59, %61 : vector<1x32xf32>
    %63 = vector.extract_strided_slice %55 {offsets = [0, 64], sizes = [1, 32], strides = [1, 1]} : vector<1x96xf32> to vector<1x32xf32>
    %64 = math.tanh %62 : vector<1x32xf32>
    %65 = arith.mulf %63, %64 : vector<1x32xf32>
    %66 = vector.extract_strided_slice %6 {offsets = [3, 0], sizes = [1, 128], strides = [1, 1]} : vector<8x128xf32> to vector<1x128xf32>
    %cst_13 = arith.constant dense<0.000000e+00> : vector<1x128xf32>
    %67 = tpu.matmul %65, %1, %cst_13 {dimension_numbers = #tpu.dot_dimension_numbers<[1], [0], [0], [1], [0, 0, 1, 1], [], []>} : vector<1x32xf32>, vector<32x128xf32>, vector<1x128xf32> -> vector<1x128xf32>
    %68 = arith.addf %66, %67 : vector<1x128xf32>
    %69 = vector.extract_strided_slice %68 {offsets = [0, 0], sizes = [1, 96], strides = [1, 1]} : vector<1x128xf32> to vector<1x96xf32>
    %70 = arith.negf %69 : vector<1x96xf32>
    %71 = math.exp %70 : vector<1x96xf32>
    %cst_14 = arith.constant 1.000000e+00 : f32
    %72 = vector.broadcast %cst_14 : f32 to vector<1x96xf32>
    %73 = arith.addf %72, %71 : vector<1x96xf32>
    %74 = arith.divf %72, %73 : vector<1x96xf32>
    %75 = vector.extract_strided_slice %68 {offsets = [0, 96], sizes = [1, 32], strides = [1, 1]} : vector<1x128xf32> to vector<1x32xf32>
    %76 = math.tanh %75 : vector<1x32xf32>
    %77 = vector.extract_strided_slice %74 {offsets = [0, 32], sizes = [1, 32], strides = [1, 1]} : vector<1x96xf32> to vector<1x32xf32>
    %78 = arith.mulf %77, %62 : vector<1x32xf32>
    %79 = vector.extract_strided_slice %74 {offsets = [0, 0], sizes = [1, 32], strides = [1, 1]} : vector<1x96xf32> to vector<1x32xf32>
    %80 = arith.mulf %79, %76 : vector<1x32xf32>
    %81 = arith.addf %78, %80 : vector<1x32xf32>
    %82 = vector.extract_strided_slice %74 {offsets = [0, 64], sizes = [1, 32], strides = [1, 1]} : vector<1x96xf32> to vector<1x32xf32>
    %83 = math.tanh %81 : vector<1x32xf32>
    %84 = arith.mulf %82, %83 : vector<1x32xf32>
    %85 = vector.extract_strided_slice %6 {offsets = [4, 0], sizes = [1, 128], strides = [1, 1]} : vector<8x128xf32> to vector<1x128xf32>
    %cst_15 = arith.constant dense<0.000000e+00> : vector<1x128xf32>
    %86 = tpu.matmul %84, %1, %cst_15 {dimension_numbers = #tpu.dot_dimension_numbers<[1], [0], [0], [1], [0, 0, 1, 1], [], []>} : vector<1x32xf32>, vector<32x128xf32>, vector<1x128xf32> -> vector<1x128xf32>
    %87 = arith.addf %85, %86 : vector<1x128xf32>
    %88 = vector.extract_strided_slice %87 {offsets = [0, 0], sizes = [1, 96], strides = [1, 1]} : vector<1x128xf32> to vector<1x96xf32>
    %89 = arith.negf %88 : vector<1x96xf32>
    %90 = math.exp %89 : vector<1x96xf32>
    %cst_16 = arith.constant 1.000000e+00 : f32
    %91 = vector.broadcast %cst_16 : f32 to vector<1x96xf32>
    %92 = arith.addf %91, %90 : vector<1x96xf32>
    %93 = arith.divf %91, %92 : vector<1x96xf32>
    %94 = vector.extract_strided_slice %87 {offsets = [0, 96], sizes = [1, 32], strides = [1, 1]} : vector<1x128xf32> to vector<1x32xf32>
    %95 = math.tanh %94 : vector<1x32xf32>
    %96 = vector.extract_strided_slice %93 {offsets = [0, 32], sizes = [1, 32], strides = [1, 1]} : vector<1x96xf32> to vector<1x32xf32>
    %97 = arith.mulf %96, %81 : vector<1x32xf32>
    %98 = vector.extract_strided_slice %93 {offsets = [0, 0], sizes = [1, 32], strides = [1, 1]} : vector<1x96xf32> to vector<1x32xf32>
    %99 = arith.mulf %98, %95 : vector<1x32xf32>
    %100 = arith.addf %97, %99 : vector<1x32xf32>
    %101 = vector.extract_strided_slice %93 {offsets = [0, 64], sizes = [1, 32], strides = [1, 1]} : vector<1x96xf32> to vector<1x32xf32>
    %102 = math.tanh %100 : vector<1x32xf32>
    %103 = arith.mulf %101, %102 : vector<1x32xf32>
    %104 = vector.extract_strided_slice %6 {offsets = [5, 0], sizes = [1, 128], strides = [1, 1]} : vector<8x128xf32> to vector<1x128xf32>
    %cst_17 = arith.constant dense<0.000000e+00> : vector<1x128xf32>
    %105 = tpu.matmul %103, %1, %cst_17 {dimension_numbers = #tpu.dot_dimension_numbers<[1], [0], [0], [1], [0, 0, 1, 1], [], []>} : vector<1x32xf32>, vector<32x128xf32>, vector<1x128xf32> -> vector<1x128xf32>
    %106 = arith.addf %104, %105 : vector<1x128xf32>
    %107 = vector.extract_strided_slice %106 {offsets = [0, 0], sizes = [1, 96], strides = [1, 1]} : vector<1x128xf32> to vector<1x96xf32>
    %108 = arith.negf %107 : vector<1x96xf32>
    %109 = math.exp %108 : vector<1x96xf32>
    %cst_18 = arith.constant 1.000000e+00 : f32
    %110 = vector.broadcast %cst_18 : f32 to vector<1x96xf32>
    %111 = arith.addf %110, %109 : vector<1x96xf32>
    %112 = arith.divf %110, %111 : vector<1x96xf32>
    %113 = vector.extract_strided_slice %106 {offsets = [0, 96], sizes = [1, 32], strides = [1, 1]} : vector<1x128xf32> to vector<1x32xf32>
    %114 = math.tanh %113 : vector<1x32xf32>
    %115 = vector.extract_strided_slice %112 {offsets = [0, 32], sizes = [1, 32], strides = [1, 1]} : vector<1x96xf32> to vector<1x32xf32>
    %116 = arith.mulf %115, %100 : vector<1x32xf32>
    %117 = vector.extract_strided_slice %112 {offsets = [0, 0], sizes = [1, 32], strides = [1, 1]} : vector<1x96xf32> to vector<1x32xf32>
    %118 = arith.mulf %117, %114 : vector<1x32xf32>
    %119 = arith.addf %116, %118 : vector<1x32xf32>
    %120 = vector.extract_strided_slice %112 {offsets = [0, 64], sizes = [1, 32], strides = [1, 1]} : vector<1x96xf32> to vector<1x32xf32>
    %121 = math.tanh %119 : vector<1x32xf32>
    %122 = arith.mulf %120, %121 : vector<1x32xf32>
    %123 = vector.extract_strided_slice %6 {offsets = [6, 0], sizes = [1, 128], strides = [1, 1]} : vector<8x128xf32> to vector<1x128xf32>
    %cst_19 = arith.constant dense<0.000000e+00> : vector<1x128xf32>
    %124 = tpu.matmul %122, %1, %cst_19 {dimension_numbers = #tpu.dot_dimension_numbers<[1], [0], [0], [1], [0, 0, 1, 1], [], []>} : vector<1x32xf32>, vector<32x128xf32>, vector<1x128xf32> -> vector<1x128xf32>
    %125 = arith.addf %123, %124 : vector<1x128xf32>
    %126 = vector.extract_strided_slice %125 {offsets = [0, 0], sizes = [1, 96], strides = [1, 1]} : vector<1x128xf32> to vector<1x96xf32>
    %127 = arith.negf %126 : vector<1x96xf32>
    %128 = math.exp %127 : vector<1x96xf32>
    %cst_20 = arith.constant 1.000000e+00 : f32
    %129 = vector.broadcast %cst_20 : f32 to vector<1x96xf32>
    %130 = arith.addf %129, %128 : vector<1x96xf32>
    %131 = arith.divf %129, %130 : vector<1x96xf32>
    %132 = vector.extract_strided_slice %125 {offsets = [0, 96], sizes = [1, 32], strides = [1, 1]} : vector<1x128xf32> to vector<1x32xf32>
    %133 = math.tanh %132 : vector<1x32xf32>
    %134 = vector.extract_strided_slice %131 {offsets = [0, 32], sizes = [1, 32], strides = [1, 1]} : vector<1x96xf32> to vector<1x32xf32>
    %135 = arith.mulf %134, %119 : vector<1x32xf32>
    %136 = vector.extract_strided_slice %131 {offsets = [0, 0], sizes = [1, 32], strides = [1, 1]} : vector<1x96xf32> to vector<1x32xf32>
    %137 = arith.mulf %136, %133 : vector<1x32xf32>
    %138 = arith.addf %135, %137 : vector<1x32xf32>
    %139 = vector.extract_strided_slice %131 {offsets = [0, 64], sizes = [1, 32], strides = [1, 1]} : vector<1x96xf32> to vector<1x32xf32>
    %140 = math.tanh %138 : vector<1x32xf32>
    %141 = arith.mulf %139, %140 : vector<1x32xf32>
    %142 = vector.extract_strided_slice %6 {offsets = [7, 0], sizes = [1, 128], strides = [1, 1]} : vector<8x128xf32> to vector<1x128xf32>
    %cst_21 = arith.constant dense<0.000000e+00> : vector<1x128xf32>
    %143 = tpu.matmul %141, %1, %cst_21 {dimension_numbers = #tpu.dot_dimension_numbers<[1], [0], [0], [1], [0, 0, 1, 1], [], []>} : vector<1x32xf32>, vector<32x128xf32>, vector<1x128xf32> -> vector<1x128xf32>
    %144 = arith.addf %142, %143 : vector<1x128xf32>
    %145 = vector.extract_strided_slice %144 {offsets = [0, 0], sizes = [1, 96], strides = [1, 1]} : vector<1x128xf32> to vector<1x96xf32>
    %146 = arith.negf %145 : vector<1x96xf32>
    %147 = math.exp %146 : vector<1x96xf32>
    %cst_22 = arith.constant 1.000000e+00 : f32
    %148 = vector.broadcast %cst_22 : f32 to vector<1x96xf32>
    %149 = arith.addf %148, %147 : vector<1x96xf32>
    %150 = arith.divf %148, %149 : vector<1x96xf32>
    %151 = vector.extract_strided_slice %144 {offsets = [0, 96], sizes = [1, 32], strides = [1, 1]} : vector<1x128xf32> to vector<1x32xf32>
    %152 = math.tanh %151 : vector<1x32xf32>
    %153 = vector.extract_strided_slice %150 {offsets = [0, 32], sizes = [1, 32], strides = [1, 1]} : vector<1x96xf32> to vector<1x32xf32>
    %154 = arith.mulf %153, %138 : vector<1x32xf32>
    %155 = vector.extract_strided_slice %150 {offsets = [0, 0], sizes = [1, 32], strides = [1, 1]} : vector<1x96xf32> to vector<1x32xf32>
    %156 = arith.mulf %155, %152 : vector<1x32xf32>
    %157 = arith.addf %154, %156 : vector<1x32xf32>
    %158 = vector.extract_strided_slice %150 {offsets = [0, 64], sizes = [1, 32], strides = [1, 1]} : vector<1x96xf32> to vector<1x32xf32>
    %159 = math.tanh %157 : vector<1x32xf32>
    %160 = arith.mulf %158, %159 : vector<1x32xf32>
    %161 = tpu.concatenate %27, %46, %65, %84, %103, %122, %141, %160 in 0 : vector<1x32xf32>, vector<1x32xf32>, vector<1x32xf32>, vector<1x32xf32>, vector<1x32xf32>, vector<1x32xf32>, vector<1x32xf32>, vector<1x32xf32> -> vector<8x32xf32>
    %c56 = arith.constant 56 : index
    %c0_23 = arith.constant 0 : index
    %162 = vector.load %arg1[%c56, %c0_23] : memref<136x128xf32, #tpu.memory_space<vmem>>, vector<32x32xf32>
    %c49 = arith.constant 49 : index
    %c0_24 = arith.constant 0 : index
    %163 = vector.load %arg1[%c49, %c0_24] : memref<136x128xf32, #tpu.memory_space<vmem>>, vector<1x32xf32>
    %cst_25 = arith.constant dense<0.000000e+00> : vector<8x32xf32>
    %164 = tpu.matmul %161, %162, %cst_25 {dimension_numbers = #tpu.dot_dimension_numbers<[1], [0], [0], [1], [0, 0, 1, 1], [], []>} : vector<8x32xf32>, vector<32x32xf32>, vector<8x32xf32> -> vector<8x32xf32>
    %165 = vector.broadcast %163 : vector<1x32xf32> to vector<8x32xf32>
    %166 = arith.addf %164, %165 : vector<8x32xf32>
    %cst_26 = arith.constant 0.000000e+00 : f32
    %167 = vector.broadcast %cst_26 : f32 to vector<8x32xf32>
    %168 = arith.maximumf %166, %167 : vector<8x32xf32>
    %c88 = arith.constant 88 : index
    %c0_27 = arith.constant 0 : index
    %169 = vector.load %arg1[%c88, %c0_27] : memref<136x128xf32, #tpu.memory_space<vmem>>, vector<32x16xf32>
    %c50 = arith.constant 50 : index
    %c0_28 = arith.constant 0 : index
    %170 = vector.load %arg1[%c50, %c0_28] : memref<136x128xf32, #tpu.memory_space<vmem>>, vector<1x16xf32>
    %cst_29 = arith.constant dense<0.000000e+00> : vector<8x16xf32>
    %171 = tpu.matmul %168, %169, %cst_29 {dimension_numbers = #tpu.dot_dimension_numbers<[1], [0], [0], [1], [0, 0, 1, 1], [], []>} : vector<8x32xf32>, vector<32x16xf32>, vector<8x16xf32> -> vector<8x16xf32>
    %172 = vector.broadcast %170 : vector<1x16xf32> to vector<8x16xf32>
    %173 = arith.addf %171, %172 : vector<8x16xf32>
    %cst_30 = arith.constant 0.000000e+00 : f32
    %174 = vector.broadcast %cst_30 : f32 to vector<8x16xf32>
    %175 = arith.maximumf %173, %174 : vector<8x16xf32>
    %c120 = arith.constant 120 : index
    %c0_31 = arith.constant 0 : index
    %176 = vector.load %arg1[%c120, %c0_31] : memref<136x128xf32, #tpu.memory_space<vmem>>, vector<16x128xf32>
    %c51 = arith.constant 51 : index
    %c0_32 = arith.constant 0 : index
    %177 = vector.load %arg1[%c51, %c0_32] : memref<136x128xf32, #tpu.memory_space<vmem>>, vector<1x128xf32>
    %cst_33 = arith.constant dense<0.000000e+00> : vector<8x128xf32>
    %178 = tpu.matmul %175, %176, %cst_33 {dimension_numbers = #tpu.dot_dimension_numbers<[1], [0], [0], [1], [0, 0, 1, 1], [], []>} : vector<8x16xf32>, vector<16x128xf32>, vector<8x128xf32> -> vector<8x128xf32>
    %179 = vector.broadcast %177 : vector<1x128xf32> to vector<8x128xf32>
    %180 = arith.addf %178, %179 : vector<8x128xf32>
    %181 = tpu.iota {dimensions = array<i32: 1>} : vector<8x128xi32>
    %c10_i32 = arith.constant 10 : i32
    %182 = vector.broadcast %c10_i32 : i32 to vector<8x128xi32>
    %183 = arith.cmpi slt, %181, %182 : vector<8x128xi32>
    %cst_34 = arith.constant 0xFF800000 : f32
    %184 = vector.broadcast %cst_34 : f32 to vector<8x128xf32>
    %185 = arith.select %183, %180, %184 : vector<8x128xi1>, vector<8x128xf32>
    %cst_35 = arith.constant dense<0xFF800000> : vector<8xf32>
    %186 = vector.multi_reduction <maximumf>, %185, %cst_35 [1] : vector<8x128xf32> to vector<8xf32>
    %187 = vector.shape_cast %186 : vector<8xf32> to vector<8x1xf32>
    %188 = vector.broadcast %187 : vector<8x1xf32> to vector<8x128xf32>
    %189 = arith.subf %185, %188 : vector<8x128xf32>
    %190 = math.exp %189 : vector<8x128xf32>
    %cst_36 = arith.constant dense<0.000000e+00> : vector<8xf32>
    %191 = vector.multi_reduction <add>, %190, %cst_36 [1] : vector<8x128xf32> to vector<8xf32>
    %192 = vector.shape_cast %191 : vector<8xf32> to vector<8x1xf32>
    %193 = tpu.reciprocal %192 {approx = true} : vector<8x1xf32> -> vector<8x1xf32>
    %194 = arith.mulf %192, %193 : vector<8x1xf32>
    %cst_37 = arith.constant 2.000000e+00 : f32
    %195 = vector.broadcast %cst_37 : f32 to vector<8x1xf32>
    %196 = arith.subf %195, %194 : vector<8x1xf32>
    %197 = arith.mulf %193, %196 : vector<8x1xf32>
    %198 = vector.broadcast %197 : vector<8x1xf32> to vector<8x128xf32>
    %199 = arith.mulf %190, %198 : vector<8x128xf32>
    %c0_38 = arith.constant 0 : index
    %c0_39 = arith.constant 0 : index
    %200 = vector.load %arg2[%c0_38, %c0_39] : memref<8x128xf32, #tpu.memory_space<vmem>>, vector<8x128xf32>
    tpu.vector_store %arg2[%c0_38, %c0_39], %199 {strides = array<i32>} : memref<8x128xf32, #tpu.memory_space<vmem>>, vector<8x128xf32>,
    return
  }
}

</mosaic_0001>

<llo_original>
// kernel: _impl.1
$region0: #{_impl.1}
  #allocation0 [shape = 'u32[]', space=smem, size = 0x4, offset = 0x4, fixed_abs, tag = 'smem constant byte address 0x4 - core index']
  #allocation1 [shape = 'u32[144,128]{1,0:T(1,128)}', space=vmem, size = 0x12000, scoped, tag = 'internal scratch']
  %s0 = inlined_call_operand.vmem [shape: f32[8,16], index: 0, kind: input, shape index: {}]
  %s1 = inlined_call_operand.hbm [shape: f32[136,128], index: 1, kind: input, shape index: {}]
  %s2 = inlined_call_operand.hbm [shape: f32[8,128], index: 2, kind: output, shape index: {}]
  %s3 = sld [smem:[#allocation0]]
  $region22: #{_impl.1} parent=0
    _
  %s5 = ssub.s32 1, %s3
  %s6 = scalar_select 0, %s5, %s3
  $region1: #{_impl.1} parent=0
    #allocation2 [shape = 'u8[69632]{0}', space=vmem, size = 0x11000, scoped, tag = 'input window, operand 1, single buffered']
    #allocation3 [shape = 's32[1]{0}', space=sflag, size = 0x4, scoped, tag = 'scoped memory for _impl.1']
    #allocation4 [shape = 's32[1]{0}', space=sflag, size = 0x4, scoped, tag = 'scoped memory for _impl.1']
    #allocation5 [shape = 'u8[4096]{0}', space=vmem, size = 0x1000, scoped, tag = 'output window, operand 0, single buffered']
    %7 = vsyncpa [#allocation3], 0
    %8 = vsyncpa [#allocation4], 0
    // Predicated region
    $region2: #{_impl.1} parent=1 // pred_check
      _
    $region3: #{_impl.1} parent=1 // pred_check_branch
      %10 = sbr.rel (0) target = $region5
    $region4: #{_impl.1} parent=1 // pred_region
      _
    $region5: #{_impl.1} parent=1 // pred_fallthru
      _
    // Predicated region
    $region6: #{_impl.1} parent=1 // pred_check
      _
    $region7: #{_impl.1} parent=1 // pred_check_branch
      %12 = sbr.rel (0) target = $region9
    $region8: #{_impl.1} parent=1 // pred_region
      %s14 = ssub.s32 2176, 2176
      %15 = vsyncadd [#allocation3], %s14
      %s16 = sshll.u32 [#allocation2], 4
      %s17 = int_to_ptr.vmem [resolvable:$true] %s16
      %22 = dma.hbm_to_vmem [thread:$0]  %s1, 2176, %s17, [#allocation3], 128, 128, 8
    $region9: #{_impl.1} parent=1 // pred_fallthru
      _
    // Predicated region
    $region10: #{_impl.1} parent=1 // pred_check
      _
    $region11: #{_impl.1} parent=1 // pred_check_branch
      %24 = sbr.rel (0) target = $region13
    $region12: #{_impl.1} parent=1 // pred_region
      %25 = dma.done [#allocation3], 2176
    $region13: #{_impl.1} parent=1 // pred_fallthru
      _
    %v26 = vld [vmem:[#allocation2] sm:$0xff]
    %v27 = vld [vmem:[#allocation2 + $0x8] sm:$0xff]
    %v28 = vld [vmem:[#allocation2 + $0x10] sm:$0xff]
    %v29 = vld [vmem:[#allocation2 + $0x18] sm:$0xff]
    %v30 = vld [vmem:[#allocation2 + $0x20] sm:$0xff]
    %v31 = vld [vmem:[#allocation2 + $0x28] sm:$0xff]
    %v32 = vld [vmem:[#allocation2 + $0x30] sm:$0x1]
    %v33 = vld [vmem:[%s0] sm:$0xff]
    %v34 = vlaneseq
    %v35 = vshrl.u32 %v34, 7
    %v36 = vsub.s32 0, %v35
    %v37 = vrot.slane %v32, %v36
    %vm38 = vcmask 130048
    %v40 = vsel %vm38, %v33, 0
    %42 = vmatprep.subr.mxu0 0.0
    %43 = vmatpush1.msra.mxu0 0.0
    %44 = vmatprep.subr.mxu0 0.0
    %45 = vmatpush1.msra.mxu0 0.0
    %46 = vmatprep.subr.mxu0 0.0
    %47 = vmatpush1.msra.mxu0 0.0
    %48 = vmatprep.subr.mxu0 0.0
    %49 = vmatpush1.msra.mxu0 0.0
    %50 = vmatprep.subr.mxu0 0.0
    %51 = vmatpush1.msra.mxu0 0.0
    %52 = vmatprep.subr.mxu0 0.0
    %53 = vmatpush1.msra.mxu0 0.0
    %54 = vmatprep.subr.mxu0 0.0
    %55 = vmatpush1.msra.mxu0 0.0
    %56 = vmatprep.subr.mxu0 0.0
    %57 = vmatpush1.msra.mxu0 0.0
    %58 = vmatprep.subr.mxu0 0.0
    %59 = vmatpush1.msra.mxu0 0.0
    %60 = vmatprep.subr.mxu0 0.0
    %61 = vmatpush1.msra.mxu0 0.0
    %62 = vmatprep.subr.mxu0 0.0
    %63 = vmatpush1.msra.mxu0 0.0
    %64 = vmatprep.subr.mxu0 0.0
    %65 = vmatpush1.msra.mxu0 0.0
    %66 = vmatprep.subr.mxu0 0.0
    %67 = vmatpush1.msra.mxu0 0.0
    %68 = vmatprep.subr.mxu0 0.0
    %69 = vmatpush1.msra.mxu0 0.0
    %70 = vmatprep.subr.mxu0 0.0
    %71 = vmatpush1.msra.mxu0 %v27
    %72 = vmatprep.subr.mxu0 0.0
    %73 = vmatpush1.msra.mxu0 %v26
    %74 = vmatprep.subr.mxu0 0.0
    %75 = vmatpush2.msra.mxu0 0.0
    %76 = vmatprep.subr.mxu0 0.0
    %77 = vmatpush2.msra.mxu0 0.0
    %78 = vmatprep.subr.mxu0 0.0
    %79 = vmatpush2.msra.mxu0 0.0
    %80 = vmatprep.subr.mxu0 0.0
    %81 = vmatpush2.msra.mxu0 0.0
    %82 = vmatprep.subr.mxu0 0.0
    %83 = vmatpush2.msra.mxu0 0.0
    %84 = vmatprep.subr.mxu0 0.0
    %85 = vmatpush2.msra.mxu0 0.0
    %86 = vmatprep.subr.mxu0 0.0
    %87 = vmatpush2.msra.mxu0 0.0
    %88 = vmatprep.subr.mxu0 0.0
    %89 = vmatpush2.msra.mxu0 0.0
    %90 = vmatprep.subr.mxu0 0.0
    %91 = vmatpush2.msra.mxu0 0.0
    %92 = vmatprep.subr.mxu0 0.0
    %93 = vmatpush2.msra.mxu0 0.0
    %94 = vmatprep.subr.mxu0 0.0
    %95 = vmatpush2.msra.mxu0 0.0
    %96 = vmatprep.subr.mxu0 0.0
    %97 = vmatpush2.msra.mxu0 0.0
    %98 = vmatprep.subr.mxu0 0.0
    %99 = vmatpush2.msra.mxu0 0.0
    %100 = vmatprep.subr.mxu0 0.0
    %101 = vmatpush2.msra.mxu0 0.0
    %102 = vmatprep.subr.mxu0 0.0
    %103 = vmatpush2.msra.mxu0 0.0
    %104 = vmatprep.subr.mxu0 0.0
    %105 = vmatpush2.msra.mxu0 0.0
    %106 = vmatprep.mubr.f32.mxu0 0.0
    %107 = vmatmul.mubr.f32.gmra.mxu0 %v40
    %v108 = vpop.f32.mrf.mxu0
    %v109 = vadd.f32 %v37, %v108
    %v110 = vpop.f32.mrf.mxu0
    %111 = vdwg.mxu0
    %vm112 = vcmask 261120
    %v114 = vsel %vm112, 0.0, 0
    %116 = vmatprep.subr.mxu0 0.0
    %117 = vmatpush1.msra.mxu0 0.0
    %118 = vmatprep.subr.mxu0 0.0
    %119 = vmatpush1.msra.mxu0 0.0
    %120 = vmatprep.subr.mxu0 0.0
    %121 = vmatpush1.msra.mxu0 0.0
    %122 = vmatprep.subr.mxu0 0.0
    %123 = vmatpush1.msra.mxu0 0.0
    %124 = vmatprep.subr.mxu0 0.0
    %125 = vmatpush1.msra.mxu0 0.0
    %126 = vmatprep.subr.mxu0 0.0
    %127 = vmatpush1.msra.mxu0 0.0
    %128 = vmatprep.subr.mxu0 0.0
    %129 = vmatpush1.msra.mxu0 0.0
    %130 = vmatprep.subr.mxu0 0.0
    %131 = vmatpush1.msra.mxu0 0.0
    %132 = vmatprep.subr.mxu0 0.0
    %133 = vmatpush1.msra.mxu0 0.0
    %134 = vmatprep.subr.mxu0 0.0
    %135 = vmatpush1.msra.mxu0 0.0
    %136 = vmatprep.subr.mxu0 0.0
    %137 = vmatpush1.msra.mxu0 0.0
    %138 = vmatprep.subr.mxu0 0.0
    %139 = vmatpush1.msra.mxu0 0.0
    %140 = vmatprep.subr.mxu0 0.0
    %141 = vmatpush1.msra.mxu0 %v31
    %142 = vmatprep.subr.mxu0 0.0
    %143 = vmatpush1.msra.mxu0 %v30
    %144 = vmatprep.subr.mxu0 0.0
    %145 = vmatpush1.msra.mxu0 %v29
    %146 = vmatprep.subr.mxu0 0.0
    %147 = vmatpush1.msra.mxu0 %v28
    %148 = vmatprep.subr.mxu0 0.0
    %149 = vmatpush2.msra.mxu0 0.0
    %150 = vmatprep.subr.mxu0 0.0
    %151 = vmatpush2.msra.mxu0 0.0
    %152 = vmatprep.subr.mxu0 0.0
    %153 = vmatpush2.msra.mxu0 0.0
    %154 = vmatprep.subr.mxu0 0.0
    %155 = vmatpush2.msra.mxu0 0.0
    %156 = vmatprep.subr.mxu0 0.0
    %157 = vmatpush2.msra.mxu0 0.0
    %158 = vmatprep.subr.mxu0 0.0
    %159 = vmatpush2.msra.mxu0 0.0
    %160 = vmatprep.subr.mxu0 0.0
    %161 = vmatpush2.msra.mxu0 0.0
    %162 = vmatprep.subr.mxu0 0.0
    %163 = vmatpush2.msra.mxu0 0.0
    %164 = vmatprep.subr.mxu0 0.0
    %165 = vmatpush2.msra.mxu0 0.0
    %166 = vmatprep.subr.mxu0 0.0
    %167 = vmatpush2.msra.mxu0 0.0
    %168 = vmatprep.subr.mxu0 0.0
    %169 = vmatpush2.msra.mxu0 0.0
    %170 = vmatprep.subr.mxu0 0.0
    %171 = vmatpush2.msra.mxu0 0.0
    %172 = vmatprep.subr.mxu0 0.0
    %173 = vmatpush2.msra.mxu0 0.0
    %174 = vmatprep.subr.mxu0 0.0
    %175 = vmatpush2.msra.mxu0 0.0
    %176 = vmatprep.subr.mxu0 0.0
    %177 = vmatpush2.msra.mxu0 0.0
    %178 = vmatprep.subr.mxu0 0.0
    %179 = vmatpush2.msra.mxu0 0.0
    %180 = vmatprep.mubr.f32.mxu0 0.0
    %181 = vmatmul.mubr.f32.gmra.mxu0 %v114
    %v182 = vpop.f32.mrf.mxu0
    %v183 = vadd.f32 0.0, %v182
    %v184 = vpop.f32.mrf.mxu0
    %185 = vdwg.mxu0
    %v186 = vadd.f32 %v109, %v183
    %v187 = vxor.u32 %v186, 2147483648
    %v188 = vmul.f32 %v187, 1.442695
    %v189 = vpow.pop %v188
    %v190 = vadd.f32 %v189, 1.0
    %v191 = vrcp.pop %v190
    %v192 = vmul.f32 1.0, %v191
    %v193 = vtanh.pop %v186
    %v194 = vmul.f32 %v192, 0.0
    %196 = vrot.lane.b32.xlu0 %v193, 32
    %v197 = vpop.permute.xlu0 %196
    %v199 = vmul.f32 %v192, %v197
    %201 = vrot.lane.b32.xlu0 %v199, 32
    %v202 = vpop.permute.xlu0 %201
    %v204 = vadd.f32 %v194, %v202
    %v205 = vtanh.pop %v204
    %207 = vrot.lane.b32.xlu0 %v205, 32
    %v208 = vpop.permute.xlu0 %207
    %v210 = vmul.f32 %v192, %v208
    %212 = vrot.lane.b32.xlu0 %v210, 64
    %v213 = vpop.permute.xlu0 %212
    %v214 = vsel %vm112, %v213, 0
    %216 = vmatprep.subr.mxu0 0.0
    %217 = vmatpush1.msra.mxu0 0.0
    %218 = vmatprep.subr.mxu0 0.0
    %219 = vmatpush1.msra.mxu0 0.0
    %220 = vmatprep.subr.mxu0 0.0
    %221 = vmatpush1.msra.mxu0 0.0
    %222 = vmatprep.subr.mxu0 0.0
    %223 = vmatpush1.msra.mxu0 0.0
    %224 = vmatprep.subr.mxu0 0.0
    %225 = vmatpush1.msra.mxu0 0.0
    %226 = vmatprep.subr.mxu0 0.0
    %227 = vmatpush1.msra.mxu0 0.0
    %228 = vmatprep.subr.mxu0 0.0
    %229 = vmatpush1.msra.mxu0 0.0
    %230 = vmatprep.subr.mxu0 0.0
    %231 = vmatpush1.msra.mxu0 0.0
    %232 = vmatprep.subr.mxu0 0.0
    %233 = vmatpush1.msra.mxu0 0.0
    %234 = vmatprep.subr.mxu0 0.0
    %235 = vmatpush1.msra.mxu0 0.0
    %236 = vmatprep.subr.mxu0 0.0
    %237 = vmatpush1.msra.mxu0 0.0
    %238 = vmatprep.subr.mxu0 0.0
    %239 = vmatpush1.msra.mxu0 0.0
    %240 = vmatprep.subr.mxu0 0.0
    %241 = vmatpush1.msra.mxu0 %v31
    %242 = vmatprep.subr.mxu0 0.0
    %243 = vmatpush1.msra.mxu0 %v30
    %244 = vmatprep.subr.mxu0 0.0
    %245 = vmatpush1.msra.mxu0 %v29
    %246 = vmatprep.subr.mxu0 0.0
    %247 = vmatpush1.msra.mxu0 %v28
    %248 = vmatprep.subr.mxu0 0.0
    %249 = vmatpush2.msra.mxu0 0.0
    %250 = vmatprep.subr.mxu0 0.0
    %251 = vmatpush2.msra.mxu0 0.0
    %252 = vmatprep.subr.mxu0 0.0
    %253 = vmatpush2.msra.mxu0 0.0
    %254 = vmatprep.subr.mxu0 0.0
    %255 = vmatpush2.msra.mxu0 0.0
    %256 = vmatprep.subr.mxu0 0.0
    %257 = vmatpush2.msra.mxu0 0.0
    %258 = vmatprep.subr.mxu0 0.0
    %259 = vmatpush2.msra.mxu0 0.0
    %260 = vmatprep.subr.mxu0 0.0
    %261 = vmatpush2.msra.mxu0 0.0
    %262 = vmatprep.subr.mxu0 0.0
    %263 = vmatpush2.msra.mxu0 0.0
    %264 = vmatprep.subr.mxu0 0.0
    %265 = vmatpush2.msra.mxu0 0.0
    %266 = vmatprep.subr.mxu0 0.0
    %267 = vmatpush2.msra.mxu0 0.0
    %268 = vmatprep.subr.mxu0 0.0
    %269 = vmatpush2.msra.mxu0 0.0
    %270 = vmatprep.subr.mxu0 0.0
    %271 = vmatpush2.msra.mxu0 0.0
    %272 = vmatprep.subr.mxu0 0.0
    %273 = vmatpush2.msra.mxu0 0.0
    %274 = vmatprep.subr.mxu0 0.0
    %275 = vmatpush2.msra.mxu0 0.0
    %276 = vmatprep.subr.mxu0 0.0
    %277 = vmatpush2.msra.mxu0 0.0
    %278 = vmatprep.subr.mxu0 0.0
    %279 = vmatpush2.msra.mxu0 0.0
    %280 = vmatprep.mubr.f32.mxu0 0.0
    %281 = vmatmul.mubr.f32.gmra.mxu0 %v214
    %v282 = vpop.f32.mrf.mxu0
    %v283 = vadd.f32 0.0, %v282
    %v284 = vpop.f32.mrf.mxu0
    %285 = vdwg.mxu0
    %v287 = vrot.slane %v283, 7
    %v289 = vadd.f32 %v109, %v287
    %v290 = vxor.u32 %v289, 2147483648
    %v291 = vmul.f32 %v290, 1.442695
    %v292 = vpow.pop %v291
    %v293 = vadd.f32 %v292, 1.0
    %v294 = vrcp.pop %v293
    %v295 = vmul.f32 1.0, %v294
    %v296 = vtanh.pop %v289
    %v298 = vrot.slane %v204, 7
    %v300 = vmul.f32 %v295, %v298
    %302 = vrot.lane.b32.xlu0 %v296, 32
    %v303 = vpop.permute.xlu0 %302
    %v305 = vmul.f32 %v295, %v303
    %307 = vrot.lane.b32.xlu0 %v305, 32
    %v308 = vpop.permute.xlu0 %307
    %v310 = vadd.f32 %v300, %v308
    %v311 = vtanh.pop %v310
    %313 = vrot.lane.b32.xlu0 %v311, 32
    %v314 = vpop.permute.xlu0 %313
    %v316 = vmul.f32 %v295, %v314
    %v318 = vrot.slane %v316, 1
    %319 = vrot.lane.b32.xlu0 %v318, 64
    %v320 = vpop.permute.xlu0 %319
    %v321 = vsel %vm112, %v320, 0
    %323 = vmatprep.subr.mxu0 0.0
    %324 = vmatpush1.msra.mxu0 0.0
    %325 = vmatprep.subr.mxu0 0.0
    %326 = vmatpush1.msra.mxu0 0.0
    %327 = vmatprep.subr.mxu0 0.0
    %328 = vmatpush1.msra.mxu0 0.0
    %329 = vmatprep.subr.mxu0 0.0
    %330 = vmatpush1.msra.mxu0 0.0
    %331 = vmatprep.subr.mxu0 0.0
    %332 = vmatpush1.msra.mxu0 0.0
    %333 = vmatprep.subr.mxu0 0.0
    %334 = vmatpush1.msra.mxu0 0.0
    %335 = vmatprep.subr.mxu0 0.0
    %336 = vmatpush1.msra.mxu0 0.0
    %337 = vmatprep.subr.mxu0 0.0
    %338 = vmatpush1.msra.mxu0 0.0
    %339 = vmatprep.subr.mxu0 0.0
    %340 = vmatpush1.msra.mxu0 0.0
    %341 = vmatprep.subr.mxu0 0.0
    %342 = vmatpush1.msra.mxu0 0.0
    %343 = vmatprep.subr.mxu0 0.0
    %344 = vmatpush1.msra.mxu0 0.0
    %345 = vmatprep.subr.mxu0 0.0
    %346 = vmatpush1.msra.mxu0 0.0
    %347 = vmatprep.subr.mxu0 0.0
    %348 = vmatpush1.msra.mxu0 %v31
    %349 = vmatprep.subr.mxu0 0.0
    %350 = vmatpush1.msra.mxu0 %v30
    %351 = vmatprep.subr.mxu0 0.0
    %352 = vmatpush1.msra.mxu0 %v29
    %353 = vmatprep.subr.mxu0 0.0
    %354 = vmatpush1.msra.mxu0 %v28
    %355 = vmatprep.subr.mxu0 0.0
    %356 = vmatpush2.msra.mxu0 0.0
    %357 = vmatprep.subr.mxu0 0.0
    %358 = vmatpush2.msra.mxu0 0.0
    %359 = vmatprep.subr.mxu0 0.0
    %360 = vmatpush2.msra.mxu0 0.0
    %361 = vmatprep.subr.mxu0 0.0
    %362 = vmatpush2.msra.mxu0 0.0
    %363 = vmatprep.subr.mxu0 0.0
    %364 = vmatpush2.msra.mxu0 0.0
    %365 = vmatprep.subr.mxu0 0.0
    %366 = vmatpush2.msra.mxu0 0.0
    %367 = vmatprep.subr.mxu0 0.0
    %368 = vmatpush2.msra.mxu0 0.0
    %369 = vmatprep.subr.mxu0 0.0
    %370 = vmatpush2.msra.mxu0 0.0
    %371 = vmatprep.subr.mxu0 0.0
    %372 = vmatpush2.msra.mxu0 0.0
    %373 = vmatprep.subr.mxu0 0.0
    %374 = vmatpush2.msra.mxu0 0.0
    %375 = vmatprep.subr.mxu0 0.0
    %376 = vmatpush2.msra.mxu0 0.0
    %377 = vmatprep.subr.mxu0 0.0
    %378 = vmatpush2.msra.mxu0 0.0
    %379 = vmatprep.subr.mxu0 0.0
    %380 = vmatpush2.msra.mxu0 0.0
    %381 = vmatprep.subr.mxu0 0.0
    %382 = vmatpush2.msra.mxu0 0.0
    %383 = vmatprep.subr.mxu0 0.0
    %384 = vmatpush2.msra.mxu0 0.0
    %385 = vmatprep.subr.mxu0 0.0
    %386 = vmatpush2.msra.mxu0 0.0
    %387 = vmatprep.mubr.f32.mxu0 0.0
    %388 = vmatmul.mubr.f32.gmra.mxu0 %v321
    %v389 = vpop.f32.mrf.mxu0
    %v390 = vadd.f32 0.0, %v389
    %v391 = vpop.f32.mrf.mxu0
    %392 = vdwg.mxu0
    %v394 = vrot.slane %v390, 6
    %v396 = vadd.f32 %v109, %v394
    %v397 = vxor.u32 %v396, 2147483648
    %v398 = vmul.f32 %v397, 1.442695
    %v399 = vpow.pop %v398
    %v400 = vadd.f32 %v399, 1.0
    %v401 = vrcp.pop %v400
    %v402 = vmul.f32 1.0, %v401
    %v403 = vtanh.pop %v396
    %v405 = vrot.slane %v310, 7
    %v407 = vmul.f32 %v402, %v405
    %409 = vrot.lane.b32.xlu0 %v403, 32
    %v410 = vpop.permute.xlu0 %409
    %v412 = vmul.f32 %v402, %v410
    %414 = vrot.lane.b32.xlu0 %v412, 32
    %v415 = vpop.permute.xlu0 %414
    %v417 = vadd.f32 %v407, %v415
    %v418 = vtanh.pop %v417
    %420 = vrot.lane.b32.xlu0 %v418, 32
    %v421 = vpop.permute.xlu0 %420
    %v423 = vmul.f32 %v402, %v421
    %v425 = vrot.slane %v423, 2
    %426 = vrot.lane.b32.xlu0 %v425, 64
    %v427 = vpop.permute.xlu0 %426
    %v428 = vsel %vm112, %v427, 0
    %430 = vmatprep.subr.mxu0 0.0
    %431 = vmatpush1.msra.mxu0 0.0
    %432 = vmatprep.subr.mxu0 0.0
    %433 = vmatpush1.msra.mxu0 0.0
    %434 = vmatprep.subr.mxu0 0.0
    %435 = vmatpush1.msra.mxu0 0.0
    %436 = vmatprep.subr.mxu0 0.0
    %437 = vmatpush1.msra.mxu0 0.0
    %438 = vmatprep.subr.mxu0 0.0
    %439 = vmatpush1.msra.mxu0 0.0
    %440 = vmatprep.subr.mxu0 0.0
    %441 = vmatpush1.msra.mxu0 0.0
    %442 = vmatprep.subr.mxu0 0.0
    %443 = vmatpush1.msra.mxu0 0.0
    %444 = vmatprep.subr.mxu0 0.0
    %445 = vmatpush1.msra.mxu0 0.0
    %446 = vmatprep.subr.mxu0 0.0
    %447 = vmatpush1.msra.mxu0 0.0
    %448 = vmatprep.subr.mxu0 0.0
    %449 = vmatpush1.msra.mxu0 0.0
    %450 = vmatprep.subr.mxu0 0.0
    %451 = vmatpush1.msra.mxu0 0.0
    %452 = vmatprep.subr.mxu0 0.0
    %453 = vmatpush1.msra.mxu0 0.0
    %454 = vmatprep.subr.mxu0 0.0
    %455 = vmatpush1.msra.mxu0 %v31
    %456 = vmatprep.subr.mxu0 0.0
    %457 = vmatpush1.msra.mxu0 %v30
    %458 = vmatprep.subr.mxu0 0.0
    %459 = vmatpush1.msra.mxu0 %v29
    %460 = vmatprep.subr.mxu0 0.0
    %461 = vmatpush1.msra.mxu0 %v28
    %462 = vmatprep.subr.mxu0 0.0
    %463 = vmatpush2.msra.mxu0 0.0
    %464 = vmatprep.subr.mxu0 0.0
    %465 = vmatpush2.msra.mxu0 0.0
    %466 = vmatprep.subr.mxu0 0.0
    %467 = vmatpush2.msra.mxu0 0.0
    %468 = vmatprep.subr.mxu0 0.0
    %469 = vmatpush2.msra.mxu0 0.0
    %470 = vmatprep.subr.mxu0 0.0
    %471 = vmatpush2.msra.mxu0 0.0
    %472 = vmatprep.subr.mxu0 0.0
    %473 = vmatpush2.msra.mxu0 0.0
    %474 = vmatprep.subr.mxu0 0.0
    %475 = vmatpush2.msra.mxu0 0.0
    %476 = vmatprep.subr.mxu0 0.0
    %477 = vmatpush2.msra.mxu0 0.0
    %478 = vmatprep.subr.mxu0 0.0
    %479 = vmatpush2.msra.mxu0 0.0
    %480 = vmatprep.subr.mxu0 0.0
    %481 = vmatpush2.msra.mxu0 0.0
    %482 = vmatprep.subr.mxu0 0.0
    %483 = vmatpush2.msra.mxu0 0.0
    %484 = vmatprep.subr.mxu0 0.0
    %485 = vmatpush2.msra.mxu0 0.0
    %486 = vmatprep.subr.mxu0 0.0
    %487 = vmatpush2.msra.mxu0 0.0
    %488 = vmatprep.subr.mxu0 0.0
    %489 = vmatpush2.msra.mxu0 0.0
    %490 = vmatprep.subr.mxu0 0.0
    %491 = vmatpush2.msra.mxu0 0.0
    %492 = vmatprep.subr.mxu0 0.0
    %493 = vmatpush2.msra.mxu0 0.0
    %494 = vmatprep.mubr.f32.mxu0 0.0
    %495 = vmatmul.mubr.f32.gmra.mxu0 %v428
    %v496 = vpop.f32.mrf.mxu0
    %v497 = vadd.f32 0.0, %v496
    %v498 = vpop.f32.mrf.mxu0
    %499 = vdwg.mxu0
    %v501 = vrot.slane %v497, 5
    %v503 = vadd.f32 %v109, %v501
    %v504 = vxor.u32 %v503, 2147483648
    %v505 = vmul.f32 %v504, 1.442695
    %v506 = vpow.pop %v505
    %v507 = vadd.f32 %v506, 1.0
    %v508 = vrcp.pop %v507
    %v509 = vmul.f32 1.0, %v508
    %v510 = vtanh.pop %v503
    %v512 = vrot.slane %v417, 7
    %v514 = vmul.f32 %v509, %v512
    %516 = vrot.lane.b32.xlu0 %v510, 32
    %v517 = vpop.permute.xlu0 %516
    %v519 = vmul.f32 %v509, %v517
    %521 = vrot.lane.b32.xlu0 %v519, 32
    %v522 = vpop.permute.xlu0 %521
    %v524 = vadd.f32 %v514, %v522
    %v525 = vtanh.pop %v524
    %527 = vrot.lane.b32.xlu0 %v525, 32
    %v528 = vpop.permute.xlu0 %527
    %v530 = vmul.f32 %v509, %v528
    %v532 = vrot.slane %v530, 3
    %533 = vrot.lane.b32.xlu0 %v532, 64
    %v534 = vpop.permute.xlu0 %533
    %v535 = vsel %vm112, %v534, 0
    %537 = vmatprep.subr.mxu0 0.0
    %538 = vmatpush1.msra.mxu0 0.0
    %539 = vmatprep.subr.mxu0 0.0
    %540 = vmatpush1.msra.mxu0 0.0
    %541 = vmatprep.subr.mxu0 0.0
    %542 = vmatpush1.msra.mxu0 0.0
    %543 = vmatprep.subr.mxu0 0.0
    %544 = vmatpush1.msra.mxu0 0.0
    %545 = vmatprep.subr.mxu0 0.0
    %546 = vmatpush1.msra.mxu0 0.0
    %547 = vmatprep.subr.mxu0 0.0
    %548 = vmatpush1.msra.mxu0 0.0
    %549 = vmatprep.subr.mxu0 0.0
    %550 = vmatpush1.msra.mxu0 0.0
    %551 = vmatprep.subr.mxu0 0.0
    %552 = vmatpush1.msra.mxu0 0.0
    %553 = vmatprep.subr.mxu0 0.0
    %554 = vmatpush1.msra.mxu0 0.0
    %555 = vmatprep.subr.mxu0 0.0
    %556 = vmatpush1.msra.mxu0 0.0
    %557 = vmatprep.subr.mxu0 0.0
    %558 = vmatpush1.msra.mxu0 0.0
    %559 = vmatprep.subr.mxu0 0.0
    %560 = vmatpush1.msra.mxu0 0.0
    %561 = vmatprep.subr.mxu0 0.0
    %562 = vmatpush1.msra.mxu0 %v31
    %563 = vmatprep.subr.mxu0 0.0
    %564 = vmatpush1.msra.mxu0 %v30
    %565 = vmatprep.subr.mxu0 0.0
    %566 = vmatpush1.msra.mxu0 %v29
    %567 = vmatprep.subr.mxu0 0.0
    %568 = vmatpush1.msra.mxu0 %v28
    %569 = vmatprep.subr.mxu0 0.0
    %570 = vmatpush2.msra.mxu0 0.0
    %571 = vmatprep.subr.mxu0 0.0
    %572 = vmatpush2.msra.mxu0 0.0
    %573 = vmatprep.subr.mxu0 0.0
    %574 = vmatpush2.msra.mxu0 0.0
    %575 = vmatprep.subr.mxu0 0.0
    %576 = vmatpush2.msra.mxu0 0.0
    %577 = vmatprep.subr.mxu0 0.0
    %578 = vmatpush2.msra.mxu0 0.0
    %579 = vmatprep.subr.mxu0 0.0
    %580 = vmatpush2.msra.mxu0 0.0
    %581 = vmatprep.subr.mxu0 0.0
    %582 = vmatpush2.msra.mxu0 0.0
    %583 = vmatprep.subr.mxu0 0.0
    %584 = vmatpush2.msra.mxu0 0.0
    %585 = vmatprep.subr.mxu0 0.0
    %586 = vmatpush2.msra.mxu0 0.0
    %587 = vmatprep.subr.mxu0 0.0
    %588 = vmatpush2.msra.mxu0 0.0
    %589 = vmatprep.subr.mxu0 0.0
    %590 = vmatpush2.msra.mxu0 0.0
    %591 = vmatprep.subr.mxu0 0.0
    %592 = vmatpush2.msra.mxu0 0.0
    %593 = vmatprep.subr.mxu0 0.0
    %594 = vmatpush2.msra.mxu0 0.0
    %595 = vmatprep.subr.mxu0 0.0
    %596 = vmatpush2.msra.mxu0 0.0
    %597 = vmatprep.subr.mxu0 0.0
    %598 = vmatpush2.msra.mxu0 0.0
    %599 = vmatprep.subr.mxu0 0.0
    %600 = vmatpush2.msra.mxu0 0.0
    %601 = vmatprep.mubr.f32.mxu0 0.0
    %602 = vmatmul.mubr.f32.gmra.mxu0 %v535
    %v603 = vpop.f32.mrf.mxu0
    %v604 = vadd.f32 0.0, %v603
    %v605 = vpop.f32.mrf.mxu0
    %606 = vdwg.mxu0
    %v608 = vrot.slane %v604, 4
    %v610 = vadd.f32 %v109, %v608
    %v611 = vxor.u32 %v610, 2147483648
    %v612 = vmul.f32 %v611, 1.442695
    %v613 = vpow.pop %v612
    %v614 = vadd.f32 %v613, 1.0
    %v615 = vrcp.pop %v614
    %v616 = vmul.f32 1.0, %v615
    %v617 = vtanh.pop %v610
    %v619 = vrot.slane %v524, 7
    %v621 = vmul.f32 %v616, %v619
    %623 = vrot.lane.b32.xlu0 %v617, 32
    %v624 = vpop.permute.xlu0 %623
    %v626 = vmul.f32 %v616, %v624
    %628 = vrot.lane.b32.xlu0 %v626, 32
    %v629 = vpop.permute.xlu0 %628
    %v631 = vadd.f32 %v621, %v629
    %v632 = vtanh.pop %v631
    %634 = vrot.lane.b32.xlu0 %v632, 32
    %v635 = vpop.permute.xlu0 %634
    %v637 = vmul.f32 %v616, %v635
    %v639 = vrot.slane %v637, 4
    %640 = vrot.lane.b32.xlu0 %v639, 64
    %v641 = vpop.permute.xlu0 %640
    %v642 = vsel %vm112, %v641, 0
    %644 = vmatprep.subr.mxu0 0.0
    %645 = vmatpush1.msra.mxu0 0.0
    %646 = vmatprep.subr.mxu0 0.0
    %647 = vmatpush1.msra.mxu0 0.0
    %648 = vmatprep.subr.mxu0 0.0
    %649 = vmatpush1.msra.mxu0 0.0
    %650 = vmatprep.subr.mxu0 0.0
    %651 = vmatpush1.msra.mxu0 0.0
    %652 = vmatprep.subr.mxu0 0.0
    %653 = vmatpush1.msra.mxu0 0.0
    %654 = vmatprep.subr.mxu0 0.0
    %655 = vmatpush1.msra.mxu0 0.0
    %656 = vmatprep.subr.mxu0 0.0
    %657 = vmatpush1.msra.mxu0 0.0
    %658 = vmatprep.subr.mxu0 0.0
    %659 = vmatpush1.msra.mxu0 0.0
    %660 = vmatprep.subr.mxu0 0.0
    %661 = vmatpush1.msra.mxu0 0.0
    %662 = vmatprep.subr.mxu0 0.0
    %663 = vmatpush1.msra.mxu0 0.0
    %664 = vmatprep.subr.mxu0 0.0
    %665 = vmatpush1.msra.mxu0 0.0
    %666 = vmatprep.subr.mxu0 0.0
    %667 = vmatpush1.msra.mxu0 0.0
    %668 = vmatprep.subr.mxu0 0.0
    %669 = vmatpush1.msra.mxu0 %v31
    %670 = vmatprep.subr.mxu0 0.0
    %671 = vmatpush1.msra.mxu0 %v30
    %672 = vmatprep.subr.mxu0 0.0
    %673 = vmatpush1.msra.mxu0 %v29
    %674 = vmatprep.subr.mxu0 0.0
    %675 = vmatpush1.msra.mxu0 %v28
    %676 = vmatprep.subr.mxu0 0.0
    %677 = vmatpush2.msra.mxu0 0.0
    %678 = vmatprep.subr.mxu0 0.0
    %679 = vmatpush2.msra.mxu0 0.0
    %680 = vmatprep.subr.mxu0 0.0
    %681 = vmatpush2.msra.mxu0 0.0
    %682 = vmatprep.subr.mxu0 0.0
    %683 = vmatpush2.msra.mxu0 0.0
    %684 = vmatprep.subr.mxu0 0.0
    %685 = vmatpush2.msra.mxu0 0.0
    %686 = vmatprep.subr.mxu0 0.0
    %687 = vmatpush2.msra.mxu0 0.0
    %688 = vmatprep.subr.mxu0 0.0
    %689 = vmatpush2.msra.mxu0 0.0
    %690 = vmatprep.subr.mxu0 0.0
    %691 = vmatpush2.msra.mxu0 0.0
    %692 = vmatprep.subr.mxu0 0.0
    %693 = vmatpush2.msra.mxu0 0.0
    %694 = vmatprep.subr.mxu0 0.0
    %695 = vmatpush2.msra.mxu0 0.0
    %696 = vmatprep.subr.mxu0 0.0
    %697 = vmatpush2.msra.mxu0 0.0
    %698 = vmatprep.subr.mxu0 0.0
    %699 = vmatpush2.msra.mxu0 0.0
    %700 = vmatprep.subr.mxu0 0.0
    %701 = vmatpush2.msra.mxu0 0.0
    %702 = vmatprep.subr.mxu0 0.0
    %703 = vmatpush2.msra.mxu0 0.0
    %704 = vmatprep.subr.mxu0 0.0
    %705 = vmatpush2.msra.mxu0 0.0
    %706 = vmatprep.subr.mxu0 0.0
    %707 = vmatpush2.msra.mxu0 0.0
    %708 = vmatprep.mubr.f32.mxu0 0.0
    %709 = vmatmul.mubr.f32.gmra.mxu0 %v642
    %v710 = vpop.f32.mrf.mxu0
    %v711 = vadd.f32 0.0, %v710
    %v712 = vpop.f32.mrf.mxu0
    %713 = vdwg.mxu0
    %v715 = vrot.slane %v711, 3
    %v717 = vadd.f32 %v109, %v715
    %v718 = vxor.u32 %v717, 2147483648
    %v719 = vmul.f32 %v718, 1.442695
    %v720 = vpow.pop %v719
    %v721 = vadd.f32 %v720, 1.0
    %v722 = vrcp.pop %v721
    %v723 = vmul.f32 1.0, %v722
    %v724 = vtanh.pop %v717
    %v726 = vrot.slane %v631, 7
    %v728 = vmul.f32 %v723, %v726
    %730 = vrot.lane.b32.xlu0 %v724, 32
    %v731 = vpop.permute.xlu0 %730
    %v733 = vmul.f32 %v723, %v731
    %735 = vrot.lane.b32.xlu0 %v733, 32
    %v736 = vpop.permute.xlu0 %735
    %v738 = vadd.f32 %v728, %v736
    %v739 = vtanh.pop %v738
    %741 = vrot.lane.b32.xlu0 %v739, 32
    %v742 = vpop.permute.xlu0 %741
    %v744 = vmul.f32 %v723, %v742
    %v746 = vrot.slane %v744, 5
    %747 = vrot.lane.b32.xlu0 %v746, 64
    %v748 = vpop.permute.xlu0 %747
    %v749 = vsel %vm112, %v748, 0
    %751 = vmatprep.subr.mxu0 0.0
    %752 = vmatpush1.msra.mxu0 0.0
    %753 = vmatprep.subr.mxu0 0.0
    %754 = vmatpush1.msra.mxu0 0.0
    %755 = vmatprep.subr.mxu0 0.0
    %756 = vmatpush1.msra.mxu0 0.0
    %757 = vmatprep.subr.mxu0 0.0
    %758 = vmatpush1.msra.mxu0 0.0
    %759 = vmatprep.subr.mxu0 0.0
    %760 = vmatpush1.msra.mxu0 0.0
    %761 = vmatprep.subr.mxu0 0.0
    %762 = vmatpush1.msra.mxu0 0.0
    %763 = vmatprep.subr.mxu0 0.0
    %764 = vmatpush1.msra.mxu0 0.0
    %765 = vmatprep.subr.mxu0 0.0
    %766 = vmatpush1.msra.mxu0 0.0
    %767 = vmatprep.subr.mxu0 0.0
    %768 = vmatpush1.msra.mxu0 0.0
    %769 = vmatprep.subr.mxu0 0.0
    %770 = vmatpush1.msra.mxu0 0.0
    %771 = vmatprep.subr.mxu0 0.0
    %772 = vmatpush1.msra.mxu0 0.0
    %773 = vmatprep.subr.mxu0 0.0
    %774 = vmatpush1.msra.mxu0 0.0
    %775 = vmatprep.subr.mxu0 0.0
    %776 = vmatpush1.msra.mxu0 %v31
    %777 = vmatprep.subr.mxu0 0.0
    %778 = vmatpush1.msra.mxu0 %v30
    %779 = vmatprep.subr.mxu0 0.0
    %780 = vmatpush1.msra.mxu0 %v29
    %781 = vmatprep.subr.mxu0 0.0
    %782 = vmatpush1.msra.mxu0 %v28
    %783 = vmatprep.subr.mxu0 0.0
    %784 = vmatpush2.msra.mxu0 0.0
    %785 = vmatprep.subr.mxu0 0.0
    %786 = vmatpush2.msra.mxu0 0.0
    %787 = vmatprep.subr.mxu0 0.0
    %788 = vmatpush2.msra.mxu0 0.0
    %789 = vmatprep.subr.mxu0 0.0
    %790 = vmatpush2.msra.mxu0 0.0
    %791 = vmatprep.subr.mxu0 0.0
    %792 = vmatpush2.msra.mxu0 0.0
    %793 = vmatprep.subr.mxu0 0.0
    %794 = vmatpush2.msra.mxu0 0.0
    %795 = vmatprep.subr.mxu0 0.0
    %796 = vmatpush2.msra.mxu0 0.0
    %797 = vmatprep.subr.mxu0 0.0
    %798 = vmatpush2.msra.mxu0 0.0
    %799 = vmatprep.subr.mxu0 0.0
    %800 = vmatpush2.msra.mxu0 0.0
    %801 = vmatprep.subr.mxu0 0.0
    %802 = vmatpush2.msra.mxu0 0.0
    %803 = vmatprep.subr.mxu0 0.0
    %804 = vmatpush2.msra.mxu0 0.0
    %805 = vmatprep.subr.mxu0 0.0
    %806 = vmatpush2.msra.mxu0 0.0
    %807 = vmatprep.subr.mxu0 0.0
    %808 = vmatpush2.msra.mxu0 0.0
    %809 = vmatprep.subr.mxu0 0.0
    %810 = vmatpush2.msra.mxu0 0.0
    %811 = vmatprep.subr.mxu0 0.0
    %812 = vmatpush2.msra.mxu0 0.0
    %813 = vmatprep.subr.mxu0 0.0
    %814 = vmatpush2.msra.mxu0 0.0
    %815 = vmatprep.mubr.f32.mxu0 0.0
    %816 = vmatmul.mubr.f32.gmra.mxu0 %v749
    %v817 = vpop.f32.mrf.mxu0
    %v818 = vadd.f32 0.0, %v817
    %v819 = vpop.f32.mrf.mxu0
    %820 = vdwg.mxu0
    %v822 = vrot.slane %v818, 2
    %v824 = vadd.f32 %v109, %v822
    %v825 = vxor.u32 %v824, 2147483648
    %v826 = vmul.f32 %v825, 1.442695
    %v827 = vpow.pop %v826
    %v828 = vadd.f32 %v827, 1.0
    %v829 = vrcp.pop %v828
    %v830 = vmul.f32 1.0, %v829
    %v831 = vtanh.pop %v824
    %v833 = vrot.slane %v738, 7
    %v835 = vmul.f32 %v830, %v833
    %837 = vrot.lane.b32.xlu0 %v831, 32
    %v838 = vpop.permute.xlu0 %837
    %v840 = vmul.f32 %v830, %v838
    %842 = vrot.lane.b32.xlu0 %v840, 32
    %v843 = vpop.permute.xlu0 %842
    %v845 = vadd.f32 %v835, %v843
    %v846 = vtanh.pop %v845
    %848 = vrot.lane.b32.xlu0 %v846, 32
    %v849 = vpop.permute.xlu0 %848
    %v851 = vmul.f32 %v830, %v849
    %v853 = vrot.slane %v851, 6
    %854 = vrot.lane.b32.xlu0 %v853, 64
    %v855 = vpop.permute.xlu0 %854
    %v856 = vsel %vm112, %v855, 0
    %858 = vmatprep.subr.mxu0 0.0
    %859 = vmatpush1.msra.mxu0 0.0
    %860 = vmatprep.subr.mxu0 0.0
    %861 = vmatpush1.msra.mxu0 0.0
    %862 = vmatprep.subr.mxu0 0.0
    %863 = vmatpush1.msra.mxu0 0.0
    %864 = vmatprep.subr.mxu0 0.0
    %865 = vmatpush1.msra.mxu0 0.0
    %866 = vmatprep.subr.mxu0 0.0
    %867 = vmatpush1.msra.mxu0 0.0
    %868 = vmatprep.subr.mxu0 0.0
    %869 = vmatpush1.msra.mxu0 0.0
    %870 = vmatprep.subr.mxu0 0.0
    %871 = vmatpush1.msra.mxu0 0.0
    %872 = vmatprep.subr.mxu0 0.0
    %873 = vmatpush1.msra.mxu0 0.0
    %874 = vmatprep.subr.mxu0 0.0
    %875 = vmatpush1.msra.mxu0 0.0
    %876 = vmatprep.subr.mxu0 0.0
    %877 = vmatpush1.msra.mxu0 0.0
    %878 = vmatprep.subr.mxu0 0.0
    %879 = vmatpush1.msra.mxu0 0.0
    %880 = vmatprep.subr.mxu0 0.0
    %881 = vmatpush1.msra.mxu0 0.0
    %882 = vmatprep.subr.mxu0 0.0
    %883 = vmatpush1.msra.mxu0 %v31
    %884 = vmatprep.subr.mxu0 0.0
    %885 = vmatpush1.msra.mxu0 %v30
    %886 = vmatprep.subr.mxu0 0.0
    %887 = vmatpush1.msra.mxu0 %v29
    %888 = vmatprep.subr.mxu0 0.0
    %889 = vmatpush1.msra.mxu0 %v28
    %890 = vmatprep.subr.mxu0 0.0
    %891 = vmatpush2.msra.mxu0 0.0
    %892 = vmatprep.subr.mxu0 0.0
    %893 = vmatpush2.msra.mxu0 0.0
    %894 = vmatprep.subr.mxu0 0.0
    %895 = vmatpush2.msra.mxu0 0.0
    %896 = vmatprep.subr.mxu0 0.0
    %897 = vmatpush2.msra.mxu0 0.0
    %898 = vmatprep.subr.mxu0 0.0
    %899 = vmatpush2.msra.mxu0 0.0
    %900 = vmatprep.subr.mxu0 0.0
    %901 = vmatpush2.msra.mxu0 0.0
    %902 = vmatprep.subr.mxu0 0.0
    %903 = vmatpush2.msra.mxu0 0.0
    %904 = vmatprep.subr.mxu0 0.0
    %905 = vmatpush2.msra.mxu0 0.0
    %906 = vmatprep.subr.mxu0 0.0
    %907 = vmatpush2.msra.mxu0 0.0
    %908 = vmatprep.subr.mxu0 0.0
    %909 = vmatpush2.msra.mxu0 0.0
    %910 = vmatprep.subr.mxu0 0.0
    %911 = vmatpush2.msra.mxu0 0.0
    %912 = vmatprep.subr.mxu0 0.0
    %913 = vmatpush2.msra.mxu0 0.0
    %914 = vmatprep.subr.mxu0 0.0
    %915 = vmatpush2.msra.mxu0 0.0
    %916 = vmatprep.subr.mxu0 0.0
    %917 = vmatpush2.msra.mxu0 0.0
    %918 = vmatprep.subr.mxu0 0.0
    %919 = vmatpush2.msra.mxu0 0.0
    %920 = vmatprep.subr.mxu0 0.0
    %921 = vmatpush2.msra.mxu0 0.0
    %922 = vmatprep.mubr.f32.mxu0 0.0
    %923 = vmatmul.mubr.f32.gmra.mxu0 %v856
    %v924 = vpop.f32.mrf.mxu0
    %v925 = vadd.f32 0.0, %v924
    %v926 = vpop.f32.mrf.mxu0
    %927 = vdwg.mxu0
    %v929 = vrot.slane %v925, 1
    %v931 = vadd.f32 %v109, %v929
    %v932 = vxor.u32 %v931, 2147483648
    %v933 = vmul.f32 %v932, 1.442695
    %v934 = vpow.pop %v933
    %v935 = vadd.f32 %v934, 1.0
    %v936 = vrcp.pop %v935
    %v937 = vmul.f32 1.0, %v936
    %v938 = vtanh.pop %v931
    %v940 = vrot.slane %v845, 7
    %v942 = vmul.f32 %v937, %v940
    %944 = vrot.lane.b32.xlu0 %v938, 32
    %v945 = vpop.permute.xlu0 %944
    %v947 = vmul.f32 %v937, %v945
    %949 = vrot.lane.b32.xlu0 %v947, 32
    %v950 = vpop.permute.xlu0 %949
    %v952 = vadd.f32 %v942, %v950
    %v953 = vtanh.pop %v952
    %955 = vrot.lane.b32.xlu0 %v953, 32
    %v956 = vpop.permute.xlu0 %955
    %v958 = vmul.f32 %v937, %v956
    %vm959 = vcmask 1040384
    %v960 = vsel %vm959, %v210, %v316
    %vm961 = vcmask 1041408
    %v962 = vsel %vm961, %v960, %v423
    %vm963 = vcmask 1042432
    %v964 = vsel %vm963, %v962, %v530
    %vm965 = vcmask 1043456
    %v966 = vsel %vm965, %v964, %v637
    %vm967 = vcmask 1044480
    %v968 = vsel %vm967, %v966, %v744
    %vm969 = vcmask 1045504
    %v970 = vsel %vm969, %v968, %v851
    %vm971 = vcmask 1046528
    %v972 = vsel %vm971, %v970, %v958
    %v973 = vld [vmem:[#allocation2 + $0x38] sm:$0xff]
    %v974 = vld [vmem:[#allocation2 + $0x40] sm:$0xff]
    %v975 = vld [vmem:[#allocation2 + $0x48] sm:$0xff]
    %v976 = vld [vmem:[#allocation2 + $0x50] sm:$0xff]
    %v977 = vld [vmem:[#allocation2 + $0x31] sm:$0x1]
    %v978 = vlaneseq
    %v979 = vshrl.u32 %v978, 7
    %v980 = vsub.s32 0, %v979
    %v981 = vrot.slane %v977, %v980
    %983 = vrot.lane.b32.xlu0 %v972, 64
    %v984 = vpop.permute.xlu0 %983
    %v985 = vsel %vm112, %v984, 0
    %987 = vmatprep.subr.mxu0 0.0
    %988 = vmatpush1.msra.mxu0 0.0
    %989 = vmatprep.subr.mxu0 0.0
    %990 = vmatpush1.msra.mxu0 0.0
    %991 = vmatprep.subr.mxu0 0.0
    %992 = vmatpush1.msra.mxu0 0.0
    %993 = vmatprep.subr.mxu0 0.0
    %994 = vmatpush1.msra.mxu0 0.0
    %995 = vmatprep.subr.mxu0 0.0
    %996 = vmatpush1.msra.mxu0 0.0
    %997 = vmatprep.subr.mxu0 0.0
    %998 = vmatpush1.msra.mxu0 0.0
    %999 = vmatprep.subr.mxu0 0.0
    %1000 = vmatpush1.msra.mxu0 0.0
    %1001 = vmatprep.subr.mxu0 0.0
    %1002 = vmatpush1.msra.mxu0 0.0
    %1003 = vmatprep.subr.mxu0 0.0
    %1004 = vmatpush1.msra.mxu0 0.0
    %1005 = vmatprep.subr.mxu0 0.0
    %1006 = vmatpush1.msra.mxu0 0.0
    %1007 = vmatprep.subr.mxu0 0.0
    %1008 = vmatpush1.msra.mxu0 0.0
    %1009 = vmatprep.subr.mxu0 0.0
    %1010 = vmatpush1.msra.mxu0 0.0
    %1011 = vmatprep.subr.mxu0 0.0
    %1012 = vmatpush1.msra.mxu0 %v976
    %1013 = vmatprep.subr.mxu0 0.0
    %1014 = vmatpush1.msra.mxu0 %v975
    %1015 = vmatprep.subr.mxu0 0.0
    %1016 = vmatpush1.msra.mxu0 %v974
    %1017 = vmatprep.subr.mxu0 0.0
    %1018 = vmatpush1.msra.mxu0 %v973
    %1019 = vmatprep.subr.mxu0 0.0
    %1020 = vmatpush2.msra.mxu0 0.0
    %1021 = vmatprep.subr.mxu0 0.0
    %1022 = vmatpush2.msra.mxu0 0.0
    %1023 = vmatprep.subr.mxu0 0.0
    %1024 = vmatpush2.msra.mxu0 0.0
    %1025 = vmatprep.subr.mxu0 0.0
    %1026 = vmatpush2.msra.mxu0 0.0
    %1027 = vmatprep.subr.mxu0 0.0
    %1028 = vmatpush2.msra.mxu0 0.0
    %1029 = vmatprep.subr.mxu0 0.0
    %1030 = vmatpush2.msra.mxu0 0.0
    %1031 = vmatprep.subr.mxu0 0.0
    %1032 = vmatpush2.msra.mxu0 0.0
    %1033 = vmatprep.subr.mxu0 0.0
    %1034 = vmatpush2.msra.mxu0 0.0
    %1035 = vmatprep.subr.mxu0 0.0
    %1036 = vmatpush2.msra.mxu0 0.0
    %1037 = vmatprep.subr.mxu0 0.0
    %1038 = vmatpush2.msra.mxu0 0.0
    %1039 = vmatprep.subr.mxu0 0.0
    %1040 = vmatpush2.msra.mxu0 0.0
    %1041 = vmatprep.subr.mxu0 0.0
    %1042 = vmatpush2.msra.mxu0 0.0
    %1043 = vmatprep.subr.mxu0 0.0
    %1044 = vmatpush2.msra.mxu0 0.0
    %1045 = vmatprep.subr.mxu0 0.0
    %1046 = vmatpush2.msra.mxu0 0.0
    %1047 = vmatprep.subr.mxu0 0.0
    %1048 = vmatpush2.msra.mxu0 0.0
    %1049 = vmatprep.subr.mxu0 0.0
    %1050 = vmatpush2.msra.mxu0 0.0
    %1051 = vmatprep.mubr.f32.mxu0 0.0
    %1052 = vmatmul.mubr.f32.gmra.mxu0 %v985
    %v1053 = vpop.f32.mrf.mxu0
    %v1054 = vadd.f32 %v981, %v1053
    %v1055 = vpop.f32.mrf.mxu0
    %1056 = vdwg.mxu0
    %v1057 = vmax.f32 %v1054, 0.0
    %v1058 = vld [vmem:[#allocation2 + $0x58] sm:$0xff]
    %v1059 = vld [vmem:[#allocation2 + $0x60] sm:$0xff]
    %v1060 = vld [vmem:[#allocation2 + $0x68] sm:$0xff]
    %v1061 = vld [vmem:[#allocation2 + $0x70] sm:$0xff]
    %v1062 = vld [vmem:[#allocation2 + $0x32] sm:$0x1]
    %v1063 = vlaneseq
    %v1064 = vshrl.u32 %v1063, 7
    %v1065 = vsub.s32 0, %v1064
    %v1066 = vrot.slane %v1062, %v1065
    %v1068 = vsel %vm112, %v1057, 0
    %1070 = vmatprep.subr.mxu0 0.0
    %1071 = vmatpush1.msra.mxu0 0.0
    %1072 = vmatprep.subr.mxu0 0.0
    %1073 = vmatpush1.msra.mxu0 0.0
    %1074 = vmatprep.subr.mxu0 0.0
    %1075 = vmatpush1.msra.mxu0 0.0
    %1076 = vmatprep.subr.mxu0 0.0
    %1077 = vmatpush1.msra.mxu0 0.0
    %1078 = vmatprep.subr.mxu0 0.0
    %1079 = vmatpush1.msra.mxu0 0.0
    %1080 = vmatprep.subr.mxu0 0.0
    %1081 = vmatpush1.msra.mxu0 0.0
    %1082 = vmatprep.subr.mxu0 0.0
    %1083 = vmatpush1.msra.mxu0 0.0
    %1084 = vmatprep.subr.mxu0 0.0
    %1085 = vmatpush1.msra.mxu0 0.0
    %1086 = vmatprep.subr.mxu0 0.0
    %1087 = vmatpush1.msra.mxu0 0.0
    %1088 = vmatprep.subr.mxu0 0.0
    %1089 = vmatpush1.msra.mxu0 0.0
    %1090 = vmatprep.subr.mxu0 0.0
    %1091 = vmatpush1.msra.mxu0 0.0
    %1092 = vmatprep.subr.mxu0 0.0
    %1093 = vmatpush1.msra.mxu0 0.0
    %1094 = vmatprep.subr.mxu0 0.0
    %1095 = vmatpush1.msra.mxu0 %v1061
    %1096 = vmatprep.subr.mxu0 0.0
    %1097 = vmatpush1.msra.mxu0 %v1060
    %1098 = vmatprep.subr.mxu0 0.0
    %1099 = vmatpush1.msra.mxu0 %v1059
    %1100 = vmatprep.subr.mxu0 0.0
    %1101 = vmatpush1.msra.mxu0 %v1058
    %1102 = vmatprep.subr.mxu0 0.0
    %1103 = vmatpush2.msra.mxu0 0.0
    %1104 = vmatprep.subr.mxu0 0.0
    %1105 = vmatpush2.msra.mxu0 0.0
    %1106 = vmatprep.subr.mxu0 0.0
    %1107 = vmatpush2.msra.mxu0 0.0
    %1108 = vmatprep.subr.mxu0 0.0
    %1109 = vmatpush2.msra.mxu0 0.0
    %1110 = vmatprep.subr.mxu0 0.0
    %1111 = vmatpush2.msra.mxu0 0.0
    %1112 = vmatprep.subr.mxu0 0.0
    %1113 = vmatpush2.msra.mxu0 0.0
    %1114 = vmatprep.subr.mxu0 0.0
    %1115 = vmatpush2.msra.mxu0 0.0
    %1116 = vmatprep.subr.mxu0 0.0
    %1117 = vmatpush2.msra.mxu0 0.0
    %1118 = vmatprep.subr.mxu0 0.0
    %1119 = vmatpush2.msra.mxu0 0.0
    %1120 = vmatprep.subr.mxu0 0.0
    %1121 = vmatpush2.msra.mxu0 0.0
    %1122 = vmatprep.subr.mxu0 0.0
    %1123 = vmatpush2.msra.mxu0 0.0
    %1124 = vmatprep.subr.mxu0 0.0
    %1125 = vmatpush2.msra.mxu0 0.0
    %1126 = vmatprep.subr.mxu0 0.0
    %1127 = vmatpush2.msra.mxu0 0.0
    %1128 = vmatprep.subr.mxu0 0.0
    %1129 = vmatpush2.msra.mxu0 0.0
    %1130 = vmatprep.subr.mxu0 0.0
    %1131 = vmatpush2.msra.mxu0 0.0
    %1132 = vmatprep.subr.mxu0 0.0
    %1133 = vmatpush2.msra.mxu0 0.0
    %1134 = vmatprep.mubr.f32.mxu0 0.0
    %1135 = vmatmul.mubr.f32.gmra.mxu0 %v1068
    %v1136 = vpop.f32.mrf.mxu0
    %v1137 = vadd.f32 %v1066, %v1136
    %v1138 = vpop.f32.mrf.mxu0
    %1139 = vdwg.mxu0
    %v1140 = vmax.f32 %v1137, 0.0
    %v1141 = vld [vmem:[#allocation2 + $0x78] sm:$0xff]
    %v1142 = vld [vmem:[#allocation2 + $0x80] sm:$0xff]
    %v1143 = vld [vmem:[#allocation2 + $0x33] sm:$0x1]
    %v1144 = vlaneseq
    %v1145 = vshrl.u32 %v1144, 7
    %v1146 = vsub.s32 0, %v1145
    %v1147 = vrot.slane %v1143, %v1146
    %v1149 = vsel %vm38, %v1140, 0
    %1151 = vmatprep.subr.mxu0 0.0
    %1152 = vmatpush1.msra.mxu0 0.0
    %1153 = vmatprep.subr.mxu0 0.0
    %1154 = vmatpush1.msra.mxu0 0.0
    %1155 = vmatprep.subr.mxu0 0.0
    %1156 = vmatpush1.msra.mxu0 0.0
    %1157 = vmatprep.subr.mxu0 0.0
    %1158 = vmatpush1.msra.mxu0 0.0
    %1159 = vmatprep.subr.mxu0 0.0
    %1160 = vmatpush1.msra.mxu0 0.0
    %1161 = vmatprep.subr.mxu0 0.0
    %1162 = vmatpush1.msra.mxu0 0.0
    %1163 = vmatprep.subr.mxu0 0.0
    %1164 = vmatpush1.msra.mxu0 0.0
    %1165 = vmatprep.subr.mxu0 0.0
    %1166 = vmatpush1.msra.mxu0 0.0
    %1167 = vmatprep.subr.mxu0 0.0
    %1168 = vmatpush1.msra.mxu0 0.0
    %1169 = vmatprep.subr.mxu0 0.0
    %1170 = vmatpush1.msra.mxu0 0.0
    %1171 = vmatprep.subr.mxu0 0.0
    %1172 = vmatpush1.msra.mxu0 0.0
    %1173 = vmatprep.subr.mxu0 0.0
    %1174 = vmatpush1.msra.mxu0 0.0
    %1175 = vmatprep.subr.mxu0 0.0
    %1176 = vmatpush1.msra.mxu0 0.0
    %1177 = vmatprep.subr.mxu0 0.0
    %1178 = vmatpush1.msra.mxu0 0.0
    %1179 = vmatprep.subr.mxu0 0.0
    %1180 = vmatpush1.msra.mxu0 %v1142
    %1181 = vmatprep.subr.mxu0 0.0
    %1182 = vmatpush1.msra.mxu0 %v1141
    %1183 = vmatprep.subr.mxu0 0.0
    %1184 = vmatpush2.msra.mxu0 0.0
    %1185 = vmatprep.subr.mxu0 0.0
    %1186 = vmatpush2.msra.mxu0 0.0
    %1187 = vmatprep.subr.mxu0 0.0
    %1188 = vmatpush2.msra.mxu0 0.0
    %1189 = vmatprep.subr.mxu0 0.0
    %1190 = vmatpush2.msra.mxu0 0.0
    %1191 = vmatprep.subr.mxu0 0.0
    %1192 = vmatpush2.msra.mxu0 0.0
    %1193 = vmatprep.subr.mxu0 0.0
    %1194 = vmatpush2.msra.mxu0 0.0
    %1195 = vmatprep.subr.mxu0 0.0
    %1196 = vmatpush2.msra.mxu0 0.0
    %1197 = vmatprep.subr.mxu0 0.0
    %1198 = vmatpush2.msra.mxu0 0.0
    %1199 = vmatprep.subr.mxu0 0.0
    %1200 = vmatpush2.msra.mxu0 0.0
    %1201 = vmatprep.subr.mxu0 0.0
    %1202 = vmatpush2.msra.mxu0 0.0
    %1203 = vmatprep.subr.mxu0 0.0
    %1204 = vmatpush2.msra.mxu0 0.0
    %1205 = vmatprep.subr.mxu0 0.0
    %1206 = vmatpush2.msra.mxu0 0.0
    %1207 = vmatprep.subr.mxu0 0.0
    %1208 = vmatpush2.msra.mxu0 0.0
    %1209 = vmatprep.subr.mxu0 0.0
    %1210 = vmatpush2.msra.mxu0 0.0
    %1211 = vmatprep.subr.mxu0 0.0
    %1212 = vmatpush2.msra.mxu0 0.0
    %1213 = vmatprep.subr.mxu0 0.0
    %1214 = vmatpush2.msra.mxu0 0.0
    %1215 = vmatprep.mubr.f32.mxu0 0.0
    %1216 = vmatmul.mubr.f32.gmra.mxu0 %v1149
    %v1217 = vpop.f32.mrf.mxu0
    %v1218 = vadd.f32 %v1147, %v1217
    %v1219 = vpop.f32.mrf.mxu0
    %1220 = vdwg.mxu0
    %v1221 = vlaneseq
    %v1222 = vand.u32 %v1221, 127
    %vm1223 = vcmp.lt.s32.totalorder %v1222, 10
    %v1224 = vsel %vm1223, %v1218, -inf
    %1225 = vmax.xlane.f32.xlu0 %v1224
    %v1226 = vpop.xlane.xlu0 %1225
    %v1227 = vsub.f32 %v1224, %v1226
    %v1228 = vmul.f32 %v1227, 1.442695
    %v1229 = vpow.pop %v1228
    %1230 = vadd.xlane.f32.xlu0 %v1229
    %v1231 = vpop.xlane.xlu0 %1230
    %v1232 = vrcp.pop %v1231
    %v1233 = vmul.f32 %v1231, %v1232
    %v1234 = vsub.f32 2.0, %v1233
    %v1235 = vmul.f32 %v1232, %v1234
    %v1236 = vmul.f32 %v1229, %v1235
    %1237 = vst [vmem:[#allocation5] sm:$0xff] %v1236
    // Predicated region
    $region14: #{_impl.1} parent=1 // pred_check
      _
    $region15: #{_impl.1} parent=1 // pred_check_branch
      %1239 = sbr.rel (0) target = $region17
    $region16: #{_impl.1} parent=1 // pred_region
      %s1241 = ssub.s32 128, 128
      %1242 = vsyncadd [#allocation4], %s1241
      %s1244 = sshll.u32 [#allocation5], 4
      %s1245 = int_to_ptr.vmem [resolvable:$true] %s1244
      %1247 = dma.vmem_to_hbm [thread:$0]  %s1245, 128, %s2, [#allocation4]
    $region17: #{_impl.1} parent=1 // pred_fallthru
      _
    // Predicated region
    $region18: #{_impl.1} parent=1 // pred_check
      _
    $region19: #{_impl.1} parent=1 // pred_check_branch
      %1249 = sbr.rel (0) target = $region21
    $region20: #{_impl.1} parent=1 // pred_region
      %1250 = dma.done [#allocation4], 128
    $region21: #{_impl.1} parent=1 // pred_fallthru
      _
    %1251 = vsyncpa [#allocation3], 1
    %1252 = vsyncpa [#allocation4], 1

</llo_original>
